<compile_context>
chip_gen: v7x
topology: tpu7x:2x2x1
jax: 0.10.0
libtpu: 0.0.40
codegen_flags: <defaults>
</compile_context>

<pallas_src>
import jax
import jax.numpy as jnp
from jax.experimental import pallas as pl
from jax.experimental.pallas import tpu as pltpu

TILE_B = 512  # default batch tile; amortizes per-grid-step overhead, VMEM-safe on all gens.


def _round_up(n, m):
    return ((n + m - 1) // m) * m


def ddpg_actor_kernel(x_ref, w1_ref, b1_ref, w2_ref, b2_ref, w3_ref, b3_ref, o_ref):
    # x tile: (tile_b, obs_pad) bf16; weights bf16 and VMEM-resident; f32 accumulation.
    x = x_ref[...]

    h1 = jnp.dot(x, w1_ref[...], preferred_element_type=jnp.float32) + b1_ref[...]
    h1 = jnp.maximum(h1, 0.0)                        # ReLU on the f32 accumulator

    h2 = jnp.dot(h1.astype(jnp.bfloat16), w2_ref[...],
                 preferred_element_type=jnp.float32) + b2_ref[...]
    h2 = jnp.maximum(h2, 0.0)                        # ReLU on the f32 accumulator

    out = jnp.dot(h2.astype(jnp.bfloat16), w3_ref[...],
                  preferred_element_type=jnp.float32) + b3_ref[...]
    o_ref[...] = jnp.tanh(out).astype(o_ref.dtype)   # Tanh in f32, lane-dense store


def ddpg_actor_forward(x, params, tile_b=TILE_B):
    """x: (batch, obs_size) f32. params: zero-padded bf16 weights + f32 biases (see init)."""
    batch, obs = x.shape
    obs_pad = params["w1"].shape[0]
    h1_dim = params["w1"].shape[1]
    h2_pad = params["w2"].shape[1]
    act_pad = params["w3"].shape[1]
    act = params["act_size"]

    # Cast to bf16 once (halves the per-tile HBM->VMEM x DMA) and zero-pad the feature
    # axis to the padded W1 rows; XLA fuses the pad + convert into a single small pass.
    if obs_pad != obs:
        x = jnp.pad(x, ((0, 0), (0, obs_pad - obs)))
    x = x.astype(jnp.bfloat16)

    # Batch tiling: single 8-aligned tile for small batches, else tile_b rows per step.
    # The ragged last block (batch % tile_b != 0) is masked by Pallas; rows are independent.
    if batch <= tile_b:
        tile_b = max(8, _round_up(batch, 8))
    grid = (pl.cdiv(batch, tile_b),)

    def resident(shape):
        # Constant block index => DMA'd once, VMEM-resident across all batch tiles.
        # Single-buffered: double-buffering a constant block only wastes VMEM.
        return pl.BlockSpec(shape, lambda i: (0, 0), pipeline_mode=pl.Buffered(1))

    out = pl.pallas_call(
        ddpg_actor_kernel,
        out_shape=jax.ShapeDtypeStruct((batch, act_pad), jnp.float32),
        grid=grid,
        in_specs=[
            pl.BlockSpec((tile_b, obs_pad), lambda i: (i, 0)),  # x: one batch tile / step
            resident((obs_pad, h1_dim)),                        # W1 (bf16, resident)
            resident((1, h1_dim)),                              # b1 (f32)
            resident((h1_dim, h2_pad)),                         # W2
            resident((1, h2_pad)),                              # b2
            resident((h2_pad, act_pad)),                        # W3 (lane-dense columns)
            resident((1, act_pad)),                             # b3
        ],
        out_specs=pl.BlockSpec((tile_b, act_pad), lambda i: (i, 0)),
        compiler_params=pltpu.CompilerParams(
            dimension_semantics=("parallel",),      # 2 TCs on v7x split the batch tiles
            vmem_limit_bytes=32 * 1024 * 1024,      # covers v5e's 16 MiB scoped default
        ),
    )(x, params["w1"], params["b1"], params["w2"], params["b2"],
      params["w3"], params["b3"])

    return out[:, :act]  # drop the zero action-padding columns


def init_params(key, obs_size, act_size):
    """PyTorch nn.Linear-style init (uniform +-1/sqrt(fan_in)) on the true dims, then
    zero-padded to TPU-friendly shapes: obs->mult of 32, h2 300->384, act->128.
    Weights stored as (in_features, out_features) = PyTorch W.T in bf16; biases f32."""
    h1, h2 = 512, 300
    obs_p = _round_up(obs_size, 32)
    h2_p = _round_up(h2, 128)
    act_p = _round_up(act_size, 128)
    true = [(obs_size, h1), (h1, h2), (h2, act_size)]
    padded = [(obs_p, h1), (h1, h2_p), (h2_p, act_p)]

    params = {"obs_size": obs_size, "act_size": act_size}
    for i, ((fi, fo), (pi_, po)) in enumerate(zip(true, padded), start=1):
        key, kw, kb = jax.random.split(key, 3)
        bound = 1.0 / (fi ** 0.5)
        w = jax.random.uniform(kw, (fi, fo), jnp.float32, minval=-bound, maxval=bound)
        b = jax.random.uniform(kb, (1, fo), jnp.float32, minval=-bound, maxval=bound)
        w = jnp.pad(w, ((0, pi_ - fi), (0, po - fo)))   # zero padding: exact semantics kept
        b = jnp.pad(b, ((0, 0), (0, po - fo)))
        params[f"w{i}"] = w.astype(jnp.bfloat16)
        params[f"b{i}"] = b
    return params


def reference_forward(x, params):
    """Pure-JAX reference with the same bf16-input / f32-accumulate precision."""
    obs_p = params["w1"].shape[0]
    x = jnp.pad(x, ((0, 0), (0, obs_p - x.shape[1]))).astype(jnp.bfloat16)
    h1 = jnp.dot(x, params["w1"], preferred_element_type=jnp.float32) + params["b1"]
    h1 = jnp.maximum(h1, 0.0)
    h2 = jnp.dot(h1.astype(jnp.bfloat16), params["w2"],
                 preferred_element_type=jnp.float32) + params["b2"]
    h2 = jnp.maximum(h2, 0.0)
    out = jnp.dot(h2.astype(jnp.bfloat16), params["w3"],
                  preferred_element_type=jnp.float32) + params["b3"]
    return jnp.tanh(out)[:, :params["act_size"]]


if __name__ == "__main__":
    obs_size, act_size = 28, 8
    batch = 300  # non-multiple of 8/128: exercises the ragged, masked last block

    key = jax.random.PRNGKey(0)
    key, kx = jax.random.split(key)
    params = init_params(key, obs_size, act_size)
    x = jax.random.normal(kx, (batch, obs_size), jnp.float32)

    ref = reference_forward(x, params)

    # Default tile (single block covering the batch).
    out = jax.block_until_ready(ddpg_actor_forward(x, params))
    assert out.shape == (batch, act_size)
    assert jnp.allclose(out, ref, atol=2e-3, rtol=2e-3), \
        f"max abs err {jnp.max(jnp.abs(out - ref))}"

    # Small tile -> multi-step grid with a ragged last block (300 = 128 + 128 + 44),
    # verifying the masked ragged-block path used when the host-side pad was dropped.
    out2 = jax.block_until_ready(ddpg_actor_forward(x, params, tile_b=128))
    assert out2.shape == (batch, act_size)
    assert jnp.allclose(out2, ref, atol=2e-3, rtol=2e-3), \
        f"max abs err (ragged grid) {jnp.max(jnp.abs(out2 - ref))}"

    print("KERNEL_OK")
</pallas_src>

<mosaic_0001>
module attributes {stable_mosaic.version = 11 : i64} {
  func.func @ddpg_actor_kernel(%arg0: i32, %arg1: memref<304x32xbf16, #tpu.memory_space<vmem>>, %arg2: memref<32x512xbf16, #tpu.memory_space<vmem>>, %arg3: memref<1x512xf32, #tpu.memory_space<vmem>>, %arg4: memref<512x384xbf16, #tpu.memory_space<vmem>>, %arg5: memref<1x384xf32, #tpu.memory_space<vmem>>, %arg6: memref<384x128xbf16, #tpu.memory_space<vmem>>, %arg7: memref<1x128xf32, #tpu.memory_space<vmem>>, %arg8: memref<304x128xf32, #tpu.memory_space<vmem>>) attributes {dimension_semantics = [#tpu.dimension_semantics<parallel>], iteration_bounds = array<i64: 1>, scalar_prefetch = 0 : i64, scratch_operands = 0 : i64, tpu.core_type = #tpu.core_type<tc>, window_params = [{transform_indices = @transform_0, window_bounds = array<i64: 304, 32>}, {pipeline_mode = #tpu.pipeline_mode<synchronous>, transform_indices = @transform_1, window_bounds = array<i64: 32, 512>}, {pipeline_mode = #tpu.pipeline_mode<synchronous>, transform_indices = @transform_2, window_bounds = array<i64: 1, 512>}, {pipeline_mode = #tpu.pipeline_mode<synchronous>, transform_indices = @transform_3, window_bounds = array<i64: 512, 384>}, {pipeline_mode = #tpu.pipeline_mode<synchronous>, transform_indices = @transform_4, window_bounds = array<i64: 1, 384>}, {pipeline_mode = #tpu.pipeline_mode<synchronous>, transform_indices = @transform_5, window_bounds = array<i64: 384, 128>}, {pipeline_mode = #tpu.pipeline_mode<synchronous>, transform_indices = @transform_6, window_bounds = array<i64: 1, 128>}, {transform_indices = @transform_7, window_bounds = array<i64: 304, 128>}]} {
    %c0 = arith.constant 0 : index
    %c0_0 = arith.constant 0 : index
    %0 = vector.load %arg1[%c0, %c0_0] : memref<304x32xbf16, #tpu.memory_space<vmem>>, vector<304x32xbf16>
    %c0_1 = arith.constant 0 : index
    %c0_2 = arith.constant 0 : index
    %1 = vector.load %arg2[%c0_1, %c0_2] : memref<32x512xbf16, #tpu.memory_space<vmem>>, vector<32x512xbf16>
    %cst = arith.constant dense<0.000000e+00> : vector<304x512xf32>
    %2 = tpu.matmul %0, %1, %cst {dimension_numbers = #tpu.dot_dimension_numbers<[1], [0], [0], [1], [0, 0, 1, 1], [], []>} : vector<304x32xbf16>, vector<32x512xbf16>, vector<304x512xf32> -> vector<304x512xf32>
    %c0_3 = arith.constant 0 : index
    %c0_4 = arith.constant 0 : index
    %3 = vector.load %arg3[%c0_3, %c0_4] : memref<1x512xf32, #tpu.memory_space<vmem>>, vector<1x512xf32>
    %4 = vector.broadcast %3 : vector<1x512xf32> to vector<304x512xf32>
    %5 = arith.addf %2, %4 : vector<304x512xf32>
    %cst_5 = arith.constant 0.000000e+00 : f32
    %6 = vector.broadcast %cst_5 : f32 to vector<304x512xf32>
    %7 = arith.maximumf %5, %6 : vector<304x512xf32>
    %8 = arith.truncf %7 : vector<304x512xf32> to vector<304x512xbf16>
    %c0_6 = arith.constant 0 : index
    %c0_7 = arith.constant 0 : index
    %9 = vector.load %arg4[%c0_6, %c0_7] : memref<512x384xbf16, #tpu.memory_space<vmem>>, vector<512x384xbf16>
    %cst_8 = arith.constant dense<0.000000e+00> : vector<304x384xf32>
    %10 = tpu.matmul %8, %9, %cst_8 {dimension_numbers = #tpu.dot_dimension_numbers<[1], [0], [0], [1], [0, 0, 1, 1], [], []>} : vector<304x512xbf16>, vector<512x384xbf16>, vector<304x384xf32> -> vector<304x384xf32>
    %c0_9 = arith.constant 0 : index
    %c0_10 = arith.constant 0 : index
    %11 = vector.load %arg5[%c0_9, %c0_10] : memref<1x384xf32, #tpu.memory_space<vmem>>, vector<1x384xf32>
    %12 = vector.broadcast %11 : vector<1x384xf32> to vector<304x384xf32>
    %13 = arith.addf %10, %12 : vector<304x384xf32>
    %cst_11 = arith.constant 0.000000e+00 : f32
    %14 = vector.broadcast %cst_11 : f32 to vector<304x384xf32>
    %15 = arith.maximumf %13, %14 : vector<304x384xf32>
    %16 = arith.truncf %15 : vector<304x384xf32> to vector<304x384xbf16>
    %c0_12 = arith.constant 0 : index
    %c0_13 = arith.constant 0 : index
    %17 = vector.load %arg6[%c0_12, %c0_13] : memref<384x128xbf16, #tpu.memory_space<vmem>>, vector<384x128xbf16>
    %cst_14 = arith.constant dense<0.000000e+00> : vector<304x128xf32>
    %18 = tpu.matmul %16, %17, %cst_14 {dimension_numbers = #tpu.dot_dimension_numbers<[1], [0], [0], [1], [0, 0, 1, 1], [], []>} : vector<304x384xbf16>, vector<384x128xbf16>, vector<304x128xf32> -> vector<304x128xf32>
    %c0_15 = arith.constant 0 : index
    %c0_16 = arith.constant 0 : index
    %19 = vector.load %arg7[%c0_15, %c0_16] : memref<1x128xf32, #tpu.memory_space<vmem>>, vector<1x128xf32>
    %20 = vector.broadcast %19 : vector<1x128xf32> to vector<304x128xf32>
    %21 = arith.addf %18, %20 : vector<304x128xf32>
    %22 = math.tanh %21 : vector<304x128xf32>
    %c0_17 = arith.constant 0 : index
    %c0_18 = arith.constant 0 : index
    %23 = vector.load %arg8[%c0_17, %c0_18] : memref<304x128xf32, #tpu.memory_space<vmem>>, vector<304x128xf32>
    tpu.vector_store %arg8[%c0_17, %c0_18], %22 {strides = array<i32>} : memref<304x128xf32, #tpu.memory_space<vmem>>, vector<304x128xf32>,
    return
  }
  func.func @transform_0(%arg0: i32) -> (i32, i32) {
    %c0_i32 = arith.constant 0 : i32
    %c0_i32_0 = arith.constant 0 : i32
    return %arg0, %c0_i32 : i32, i32
  }
  func.func @transform_1(%arg0: i32) -> (i32, i32) {
    %c0_i32 = arith.constant 0 : i32
    %c0_i32_0 = arith.constant 0 : i32
    %c0_i32_1 = arith.constant 0 : i32
    return %c0_i32, %c0_i32_0 : i32, i32
  }
  func.func @transform_2(%arg0: i32) -> (i32, i32) {
    %c0_i32 = arith.constant 0 : i32
    %c0_i32_0 = arith.constant 0 : i32
    %c0_i32_1 = arith.constant 0 : i32
    return %c0_i32, %c0_i32_0 : i32, i32
  }
  func.func @transform_3(%arg0: i32) -> (i32, i32) {
    %c0_i32 = arith.constant 0 : i32
    %c0_i32_0 = arith.constant 0 : i32
    %c0_i32_1 = arith.constant 0 : i32
    return %c0_i32, %c0_i32_0 : i32, i32
  }
  func.func @transform_4(%arg0: i32) -> (i32, i32) {
    %c0_i32 = arith.constant 0 : i32
    %c0_i32_0 = arith.constant 0 : i32
    %c0_i32_1 = arith.constant 0 : i32
    return %c0_i32, %c0_i32_0 : i32, i32
  }
  func.func @transform_5(%arg0: i32) -> (i32, i32) {
    %c0_i32 = arith.constant 0 : i32
    %c0_i32_0 = arith.constant 0 : i32
    %c0_i32_1 = arith.constant 0 : i32
    return %c0_i32, %c0_i32_0 : i32, i32
  }
  func.func @transform_6(%arg0: i32) -> (i32, i32) {
    %c0_i32 = arith.constant 0 : i32
    %c0_i32_0 = arith.constant 0 : i32
    %c0_i32_1 = arith.constant 0 : i32
    return %c0_i32, %c0_i32_0 : i32, i32
  }
  func.func @transform_7(%arg0: i32) -> (i32, i32) {
    %c0_i32 = arith.constant 0 : i32
    %c0_i32_0 = arith.constant 0 : i32
    return %arg0, %c0_i32 : i32, i32
  }
}

</mosaic_0001>

<llo_original>
// kernel: tpu_custom_call.1
$region0: #{tpu_custom_call.1}
  #allocation0 [shape = 'u32[]', space=smem, size = 0x4, offset = 0x4, fixed_abs, tag = 'smem constant byte address 0x4 - core index']
  #allocation1 [shape = 'u32[144,128]{1,0:T(1,128)}', space=vmem, size = 0x12000, scoped, tag = 'internal scratch']
  %s0 = inlined_call_operand.vmem [shape: bf16[300,32], index: 0, kind: input, shape index: {}]
  %s1 = inlined_call_operand.hbm [shape: bf16[32,512], index: 1, kind: input, shape index: {}]
  %s2 = inlined_call_operand.vmem [shape: f32[1,512], index: 2, kind: input, shape index: {}]
  %s3 = inlined_call_operand.hbm [shape: bf16[512,384], index: 3, kind: input, shape index: {}]
  %s4 = inlined_call_operand.vmem [shape: f32[1,384], index: 4, kind: input, shape index: {}]
  %s5 = inlined_call_operand.vmem [shape: bf16[384,128], index: 5, kind: input, shape index: {}]
  %s6 = inlined_call_operand.vmem [shape: f32[1,128], index: 6, kind: input, shape index: {}]
  %s7 = inlined_call_operand.hbm [shape: f32[300,128], index: 7, kind: output, shape index: {}]
  %s8 = sld [smem:[#allocation0]]
  $region46: #{tpu_custom_call.1} parent=0
    _
  %s10 = ssub.s32 1, %s8
  %s11 = scalar_select 0, %s10, %s8
  $region1: #{tpu_custom_call.1} parent=0
    #allocation2 [shape = 'u8[32768]{0}', space=vmem, size = 0x8000, scoped, tag = 'input window, operand 1, single buffered']
    #allocation3 [shape = 's32[1]{0}', space=sflag, size = 0x4, scoped, tag = 'scoped memory for tpu_custom_call.1']
    #allocation4 [shape = 's32[1]{0}', space=sflag, size = 0x4, scoped, tag = 'scoped memory for tpu_custom_call.1']
    #allocation5 [shape = 'u8[393216]{0}', space=vmem, size = 0x60000, scoped, tag = 'input window, operand 3, single buffered']
    #allocation6 [shape = 's32[1]{0}', space=sflag, size = 0x4, scoped, tag = 'scoped memory for tpu_custom_call.1']
    #allocation7 [shape = 'u8[155648]{0}', space=vmem, size = 0x26000, scoped, tag = 'output window, operand 0, single buffered']
    %12 = vsyncpa [#allocation3], 0
    %13 = vsyncpa [#allocation6], 0
    %14 = vsyncpa [#allocation4], 0
    // Predicated region
    $region2: #{tpu_custom_call.1} parent=1 // pred_check
      _
    $region3: #{tpu_custom_call.1} parent=1 // pred_check_branch
      %16 = sbr.rel (0) target = $region5
    $region4: #{tpu_custom_call.1} parent=1 // pred_region
      _
    $region5: #{tpu_custom_call.1} parent=1 // pred_fallthru
      _
    // Predicated region
    $region6: #{tpu_custom_call.1} parent=1 // pred_check
      _
    $region7: #{tpu_custom_call.1} parent=1 // pred_check_branch
      %18 = sbr.rel (0) target = $region9
    $region8: #{tpu_custom_call.1} parent=1 // pred_region
      %s20 = ssub.s32 1024, 1024
      %21 = vsyncadd [#allocation3], %s20
      %s22 = sshll.u32 [#allocation2], 4
      %s23 = int_to_ptr.vmem [resolvable:$true] %s22
      %28 = dma.hbm_to_vmem [thread:$0]  %s1, 1024, %s23, [#allocation3], 256, 256, 16
    $region9: #{tpu_custom_call.1} parent=1 // pred_fallthru
      _
    // Predicated region
    $region10: #{tpu_custom_call.1} parent=1 // pred_check
      _
    $region11: #{tpu_custom_call.1} parent=1 // pred_check_branch
      %30 = sbr.rel (0) target = $region13
    $region12: #{tpu_custom_call.1} parent=1 // pred_region
      _
    $region13: #{tpu_custom_call.1} parent=1 // pred_fallthru
      _
    // Predicated region
    $region14: #{tpu_custom_call.1} parent=1 // pred_check
      _
    $region15: #{tpu_custom_call.1} parent=1 // pred_check_branch
      %32 = sbr.rel (0) target = $region17
    $region16: #{tpu_custom_call.1} parent=1 // pred_region
      %s34 = ssub.s32 12288, 12288
      %35 = vsyncadd [#allocation6], %s34
      %s36 = sshll.u32 [#allocation5], 4
      %s37 = int_to_ptr.vmem [resolvable:$true] %s36
      %42 = dma.hbm_to_vmem [thread:$0]  %s3, 12288, %s37, [#allocation6], 192, 192, 12
    $region17: #{tpu_custom_call.1} parent=1 // pred_fallthru
      _
    // Predicated region
    $region18: #{tpu_custom_call.1} parent=1 // pred_check
      _
    $region19: #{tpu_custom_call.1} parent=1 // pred_check_branch
      %44 = sbr.rel (0) target = $region21
    $region20: #{tpu_custom_call.1} parent=1 // pred_region
      _
    $region21: #{tpu_custom_call.1} parent=1 // pred_fallthru
      _
    // Predicated region
    $region22: #{tpu_custom_call.1} parent=1 // pred_check
      _
    $region23: #{tpu_custom_call.1} parent=1 // pred_check_branch
      %46 = sbr.rel (0) target = $region25
    $region24: #{tpu_custom_call.1} parent=1 // pred_region
      _
    $region25: #{tpu_custom_call.1} parent=1 // pred_fallthru
      _
    // Predicated region
    $region26: #{tpu_custom_call.1} parent=1 // pred_check
      _
    $region27: #{tpu_custom_call.1} parent=1 // pred_check_branch
      %48 = sbr.rel (0) target = $region29
    $region28: #{tpu_custom_call.1} parent=1 // pred_region
      _
    $region29: #{tpu_custom_call.1} parent=1 // pred_fallthru
      _
    // Predicated region
    $region30: #{tpu_custom_call.1} parent=1 // pred_check
      _
    $region31: #{tpu_custom_call.1} parent=1 // pred_check_branch
      %50 = sbr.rel (0) target = $region33
    $region32: #{tpu_custom_call.1} parent=1 // pred_region
      %51 = dma.done [#allocation3], 1024
    $region33: #{tpu_custom_call.1} parent=1 // pred_fallthru
      _
    // Predicated region
    $region34: #{tpu_custom_call.1} parent=1 // pred_check
      _
    $region35: #{tpu_custom_call.1} parent=1 // pred_check_branch
      %53 = sbr.rel (0) target = $region37
    $region36: #{tpu_custom_call.1} parent=1 // pred_region
      %54 = dma.done [#allocation6], 12288
    $region37: #{tpu_custom_call.1} parent=1 // pred_fallthru
      _
    %v56 = vld [vmem:[%s0] sm:$0xf]
    %v57 = vld [vmem:[%s0 + $0x4] sm:$0xf]
    %v58 = vld [vmem:[%s0 + $0x8] sm:$0xf]
    %v59 = vld [vmem:[%s0 + $0xc] sm:$0xf]
    %v60 = vld [vmem:[%s0 + $0x10] sm:$0xf]
    %v61 = vld [vmem:[%s0 + $0x14] sm:$0xf]
    %v62 = vld [vmem:[%s0 + $0x18] sm:$0xf]
    %v63 = vld [vmem:[%s0 + $0x1c] sm:$0xf]
    %v64 = vld [vmem:[%s0 + $0x20] sm:$0xf]
    %v65 = vld [vmem:[%s0 + $0x24] sm:$0xf]
    %v66 = vld [vmem:[%s0 + $0x28] sm:$0xf]
    %v67 = vld [vmem:[%s0 + $0x2c] sm:$0xf]
    %v68 = vld [vmem:[%s0 + $0x30] sm:$0xf]
    %v69 = vld [vmem:[%s0 + $0x34] sm:$0xf]
    %v70 = vld [vmem:[%s0 + $0x38] sm:$0xf]
    %v71 = vld [vmem:[%s0 + $0x3c] sm:$0xf]
    %v72 = vld [vmem:[%s0 + $0x40] sm:$0xf]
    %v73 = vld [vmem:[%s0 + $0x44] sm:$0xf]
    %v74 = vld [vmem:[%s0 + $0x48] sm:$0xf]
    %v75 = vld [vmem:[%s0 + $0x4c] sm:$0xf]
    %v76 = vld [vmem:[%s0 + $0x50] sm:$0xf]
    %v77 = vld [vmem:[%s0 + $0x54] sm:$0xf]
    %v78 = vld [vmem:[%s0 + $0x58] sm:$0xf]
    %v79 = vld [vmem:[%s0 + $0x5c] sm:$0xf]
    %v80 = vld [vmem:[%s0 + $0x60] sm:$0xf]
    %v81 = vld [vmem:[%s0 + $0x64] sm:$0xf]
    %v82 = vld [vmem:[%s0 + $0x68] sm:$0xf]
    %v83 = vld [vmem:[%s0 + $0x6c] sm:$0xf]
    %v84 = vld [vmem:[%s0 + $0x70] sm:$0xf]
    %v85 = vld [vmem:[%s0 + $0x74] sm:$0xf]
    %v86 = vld [vmem:[%s0 + $0x78] sm:$0xf]
    %v87 = vld [vmem:[%s0 + $0x7c] sm:$0xf]
    %v88 = vld [vmem:[%s0 + $0x80] sm:$0xf]
    %v89 = vld [vmem:[%s0 + $0x84] sm:$0xf]
    %v90 = vld [vmem:[%s0 + $0x88] sm:$0xf]
    %v91 = vld [vmem:[%s0 + $0x8c] sm:$0xf]
    %v92 = vld [vmem:[%s0 + $0x90] sm:$0xf]
    %v93 = vld [vmem:[%s0 + $0x94] sm:$0xf]
    %v94 = vld [vmem:[#allocation2] sm:$0xff]
    %v95 = vld [vmem:[#allocation2 + $0x8] sm:$0xff]
    %v96 = vld [vmem:[#allocation2 + $0x10] sm:$0xff]
    %v97 = vld [vmem:[#allocation2 + $0x18] sm:$0xff]
    %v98 = vld [vmem:[#allocation2 + $0x20] sm:$0xff]
    %v99 = vld [vmem:[#allocation2 + $0x28] sm:$0xff]
    %v100 = vld [vmem:[#allocation2 + $0x30] sm:$0xff]
    %v101 = vld [vmem:[#allocation2 + $0x38] sm:$0xff]
    %v102 = vld [vmem:[%s2] sm:$0xf]
    %v104 = vlaneseq
    %v105 = vshrl.u32 %v104, 7
    %v106 = vsub.s32 0, %v105
    %v107 = vrot.slane %v102, %v106
    %v108 = vlaneseq
    %v109 = vshrl.u32 %v108, 7
    %v110 = vsub.s32 1, %v109
    %v111 = vrot.slane %v102, %v110
    %v112 = vlaneseq
    %v113 = vshrl.u32 %v112, 7
    %v114 = vsub.s32 2, %v113
    %v115 = vrot.slane %v102, %v114
    %v116 = vlaneseq
    %v117 = vshrl.u32 %v116, 7
    %v118 = vsub.s32 3, %v117
    %v119 = vrot.slane %v102, %v118
    %v162 = vunpack.c.l.b16 %v56
    %v163 = vunpack.c.l.b16 %v57
    %v164 = vunpack.c.l.b16 %v58
    %v165 = vunpack.c.l.b16 %v59
    %v166 = vunpack.c.l.b16 %v60
    %v167 = vunpack.c.l.b16 %v61
    %v168 = vunpack.c.l.b16 %v62
    %v169 = vunpack.c.l.b16 %v63
    %v170 = vunpack.c.l.b16 %v64
    %v171 = vunpack.c.l.b16 %v65
    %v172 = vunpack.c.l.b16 %v66
    %v173 = vunpack.c.l.b16 %v67
    %v174 = vunpack.c.l.b16 %v68
    %v175 = vunpack.c.l.b16 %v69
    %v176 = vunpack.c.l.b16 %v70
    %v177 = vunpack.c.l.b16 %v71
    %v178 = vunpack.c.l.b16 %v72
    %v179 = vunpack.c.l.b16 %v73
    %v180 = vunpack.c.l.b16 %v74
    %v181 = vunpack.c.l.b16 %v75
    %v182 = vunpack.c.l.b16 %v76
    %v183 = vunpack.c.l.b16 %v77
    %v184 = vunpack.c.l.b16 %v78
    %v185 = vunpack.c.l.b16 %v79
    %v186 = vunpack.c.l.b16 %v80
    %v187 = vunpack.c.l.b16 %v81
    %v188 = vunpack.c.l.b16 %v82
    %v189 = vunpack.c.l.b16 %v83
    %v190 = vunpack.c.l.b16 %v84
    %v191 = vunpack.c.l.b16 %v85
    %v192 = vunpack.c.l.b16 %v86
    %v193 = vunpack.c.l.b16 %v87
    %v194 = vunpack.c.l.b16 %v88
    %v195 = vunpack.c.l.b16 %v89
    %v196 = vunpack.c.l.b16 %v90
    %v197 = vunpack.c.l.b16 %v91
    %v198 = vunpack.c.l.b16 %v92
    %v199 = vunpack.c.l.b16 %v93
    %v200 = vpack.c.b16 %v163, %v162
    %v201 = vpack.c.b16 %v165, %v164
    %v202 = vpack.c.b16 %v167, %v166
    %v203 = vpack.c.b16 %v169, %v168
    %v204 = vpack.c.b16 %v171, %v170
    %v205 = vpack.c.b16 %v173, %v172
    %v206 = vpack.c.b16 %v175, %v174
    %v207 = vpack.c.b16 %v177, %v176
    %v208 = vpack.c.b16 %v179, %v178
    %v209 = vpack.c.b16 %v181, %v180
    %v210 = vpack.c.b16 %v183, %v182
    %v211 = vpack.c.b16 %v185, %v184
    %v212 = vpack.c.b16 %v187, %v186
    %v213 = vpack.c.b16 %v189, %v188
    %v214 = vpack.c.b16 %v191, %v190
    %v215 = vpack.c.b16 %v193, %v192
    %v216 = vpack.c.b16 %v195, %v194
    %v217 = vpack.c.b16 %v197, %v196
    %v218 = vpack.c.b16 %v199, %v198
    %v227 = vunpack.c.l.b16 %v94
    %v228 = vunpack.c.h.b16 %v94
    %v229 = vunpack.c.l.b16 %v95
    %v230 = vunpack.c.h.b16 %v95
    %v231 = vunpack.c.l.b16 %v96
    %v232 = vunpack.c.h.b16 %v96
    %v233 = vunpack.c.l.b16 %v97
    %v234 = vunpack.c.h.b16 %v97
    %v235 = vunpack.c.l.b16 %v98
    %v236 = vunpack.c.h.b16 %v98
    %v237 = vunpack.c.l.b16 %v99
    %v238 = vunpack.c.h.b16 %v99
    %v239 = vunpack.c.l.b16 %v100
    %v240 = vunpack.c.h.b16 %v100
    %v241 = vunpack.c.l.b16 %v101
    %v242 = vunpack.c.h.b16 %v101
    %v243 = vpack.c.b16 %v231, %v227
    %v244 = vpack.c.b16 %v232, %v228
    %v245 = vpack.c.b16 %v233, %v229
    %v246 = vpack.c.b16 %v234, %v230
    %v247 = vpack.c.b16 %v239, %v235
    %v248 = vpack.c.b16 %v240, %v236
    %v249 = vpack.c.b16 %v241, %v237
    %v250 = vpack.c.b16 %v242, %v238
    %vm259 = vcmask 261120
    %v261 = vsel %vm259, %v200, 0
    %v264 = vsel %vm259, %v201, 0
    %v267 = vsel %vm259, %v202, 0
    %v270 = vsel %vm259, %v203, 0
    %v273 = vsel %vm259, %v204, 0
    %v276 = vsel %vm259, %v205, 0
    %v279 = vsel %vm259, %v206, 0
    %v282 = vsel %vm259, %v207, 0
    %v285 = vsel %vm259, %v208, 0
    %v288 = vsel %vm259, %v209, 0
    %v291 = vsel %vm259, %v210, 0
    %v294 = vsel %vm259, %v211, 0
    %v297 = vsel %vm259, %v212, 0
    %v300 = vsel %vm259, %v213, 0
    %v303 = vsel %vm259, %v214, 0
    %v306 = vsel %vm259, %v215, 0
    %v309 = vsel %vm259, %v216, 0
    %v312 = vsel %vm259, %v217, 0
    %v315 = vsel %vm259, %v218, 0
    %317 = vmatprep.subr.bf16.mxu0 %v244
    %318 = vmatpush1.bf16.msra.mxu0 %v243
    %319 = vmatprep.subr.bf16.mxu0 %v248
    %320 = vmatpush1.bf16.msra.mxu0 %v247
    %321 = vmatprep.subr.bf16.mxu0 0
    %322 = vmatpush1.bf16.msra.mxu0 0
    %323 = vmatprep.subr.bf16.mxu0 0
    %324 = vmatpush1.bf16.msra.mxu0 0
    %325 = vmatprep.subr.bf16.mxu0 0
    %326 = vmatpush1.bf16.msra.mxu0 0
    %327 = vmatprep.subr.bf16.mxu0 0
    %328 = vmatpush1.bf16.msra.mxu0 0
    %329 = vmatprep.subr.bf16.mxu0 0
    %330 = vmatpush1.bf16.msra.mxu0 0
    %331 = vmatprep.subr.bf16.mxu0 0
    %332 = vmatpush1.bf16.msra.mxu0 0
    %333 = vmatprep.subr.bf16.mxu0 0
    %334 = vmatpush1.bf16.msra.mxu0 0
    %335 = vmatprep.subr.bf16.mxu0 0
    %336 = vmatpush1.bf16.msra.mxu0 0
    %337 = vmatprep.subr.bf16.mxu0 0
    %338 = vmatpush1.bf16.msra.mxu0 0
    %339 = vmatprep.subr.bf16.mxu0 0
    %340 = vmatpush1.bf16.msra.mxu0 0
    %341 = vmatprep.subr.bf16.mxu0 0
    %342 = vmatpush1.bf16.msra.mxu0 0
    %343 = vmatprep.subr.bf16.mxu0 0
    %344 = vmatpush1.bf16.msra.mxu0 0
    %345 = vmatprep.subr.bf16.mxu0 0
    %346 = vmatpush1.bf16.msra.mxu0 0
    %347 = vmatprep.subr.bf16.mxu0 0
    %348 = vmatpush1.bf16.msra.mxu0 0
    %349 = vmatprep.mubr.bf16.mxu0 0
    %350 = vmatmul.mubr.bf16.gmra.mrb[0].mxu0 %v261
    %v351 = vpop.f32.mrb[0].mxu0
    %v352 = vadd.f32 %v107, %v351
    %v353 = vpop.f32.mrb[0].mxu0
    %v354 = vadd.f32 %v111, %v353
    %v355 = vpop.f32.mrb[0].mxu0
    %v356 = vadd.f32 %v107, %v355
    %v357 = vpop.f32.mrb[0].mxu0
    %v358 = vadd.f32 %v111, %v357
    %359 = vmatprep.mubr.bf16.mxu0 0
    %360 = vmatmul.mubr.bf16.gmra.mrb[0].mxu0 %v264
    %v361 = vpop.f32.mrb[0].mxu0
    %v362 = vadd.f32 %v107, %v361
    %v363 = vpop.f32.mrb[0].mxu0
    %v364 = vadd.f32 %v111, %v363
    %v365 = vpop.f32.mrb[0].mxu0
    %v366 = vadd.f32 %v107, %v365
    %v367 = vpop.f32.mrb[0].mxu0
    %v368 = vadd.f32 %v111, %v367
    %369 = vmatprep.mubr.bf16.mxu0 0
    %370 = vmatmul.mubr.bf16.gmra.mrb[0].mxu0 %v267
    %v371 = vpop.f32.mrb[0].mxu0
    %v372 = vadd.f32 %v107, %v371
    %v373 = vpop.f32.mrb[0].mxu0
    %v374 = vadd.f32 %v111, %v373
    %v375 = vpop.f32.mrb[0].mxu0
    %v376 = vadd.f32 %v107, %v375
    %v377 = vpop.f32.mrb[0].mxu0
    %v378 = vadd.f32 %v111, %v377
    %379 = vmatprep.mubr.bf16.mxu0 0
    %380 = vmatmul.mubr.bf16.gmra.mrb[0].mxu0 %v270
    %v381 = vpop.f32.mrb[0].mxu0
    %v382 = vadd.f32 %v107, %v381
    %v383 = vpop.f32.mrb[0].mxu0
    %v384 = vadd.f32 %v111, %v383
    %v385 = vpop.f32.mrb[0].mxu0
    %v386 = vadd.f32 %v107, %v385
    %v387 = vpop.f32.mrb[0].mxu0
    %v388 = vadd.f32 %v111, %v387
    %389 = vmatprep.mubr.bf16.mxu0 0
    %390 = vmatmul.mubr.bf16.gmra.mrb[0].mxu0 %v273
    %v391 = vpop.f32.mrb[0].mxu0
    %v392 = vadd.f32 %v107, %v391
    %v393 = vpop.f32.mrb[0].mxu0
    %v394 = vadd.f32 %v111, %v393
    %v395 = vpop.f32.mrb[0].mxu0
    %v396 = vadd.f32 %v107, %v395
    %v397 = vpop.f32.mrb[0].mxu0
    %v398 = vadd.f32 %v111, %v397
    %399 = vmatprep.mubr.bf16.mxu0 0
    %400 = vmatmul.mubr.bf16.gmra.mrb[0].mxu0 %v276
    %v401 = vpop.f32.mrb[0].mxu0
    %v402 = vadd.f32 %v107, %v401
    %v403 = vpop.f32.mrb[0].mxu0
    %v404 = vadd.f32 %v111, %v403
    %v405 = vpop.f32.mrb[0].mxu0
    %v406 = vadd.f32 %v107, %v405
    %v407 = vpop.f32.mrb[0].mxu0
    %v408 = vadd.f32 %v111, %v407
    %409 = vmatprep.mubr.bf16.mxu0 0
    %410 = vmatmul.mubr.bf16.gmra.mrb[0].mxu0 %v279
    %v411 = vpop.f32.mrb[0].mxu0
    %v412 = vadd.f32 %v107, %v411
    %v413 = vpop.f32.mrb[0].mxu0
    %v414 = vadd.f32 %v111, %v413
    %v415 = vpop.f32.mrb[0].mxu0
    %v416 = vadd.f32 %v107, %v415
    %v417 = vpop.f32.mrb[0].mxu0
    %v418 = vadd.f32 %v111, %v417
    %419 = vmatprep.mubr.bf16.mxu0 0
    %420 = vmatmul.mubr.bf16.gmra.mrb[0].mxu0 %v282
    %v421 = vpop.f32.mrb[0].mxu0
    %v422 = vadd.f32 %v107, %v421
    %v423 = vpop.f32.mrb[0].mxu0
    %v424 = vadd.f32 %v111, %v423
    %v425 = vpop.f32.mrb[0].mxu0
    %v426 = vadd.f32 %v107, %v425
    %v427 = vpop.f32.mrb[0].mxu0
    %v428 = vadd.f32 %v111, %v427
    %429 = vmatprep.mubr.bf16.mxu0 0
    %430 = vmatmul.mubr.bf16.gmra.mrb[0].mxu0 %v285
    %v431 = vpop.f32.mrb[0].mxu0
    %v432 = vadd.f32 %v107, %v431
    %v433 = vpop.f32.mrb[0].mxu0
    %v434 = vadd.f32 %v111, %v433
    %v435 = vpop.f32.mrb[0].mxu0
    %v436 = vadd.f32 %v107, %v435
    %v437 = vpop.f32.mrb[0].mxu0
    %v438 = vadd.f32 %v111, %v437
    %439 = vmatprep.mubr.bf16.mxu0 0
    %440 = vmatmul.mubr.bf16.gmra.mrb[0].mxu0 %v288
    %v441 = vpop.f32.mrb[0].mxu0
    %v442 = vadd.f32 %v107, %v441
    %v443 = vpop.f32.mrb[0].mxu0
    %v444 = vadd.f32 %v111, %v443
    %v445 = vpop.f32.mrb[0].mxu0
    %v446 = vadd.f32 %v107, %v445
    %v447 = vpop.f32.mrb[0].mxu0
    %v448 = vadd.f32 %v111, %v447
    %449 = vmatprep.mubr.bf16.mxu0 0
    %450 = vmatmul.mubr.bf16.gmra.mrb[0].mxu0 %v291
    %v451 = vpop.f32.mrb[0].mxu0
    %v452 = vadd.f32 %v107, %v451
    %v453 = vpop.f32.mrb[0].mxu0
    %v454 = vadd.f32 %v111, %v453
    %v455 = vpop.f32.mrb[0].mxu0
    %v456 = vadd.f32 %v107, %v455
    %v457 = vpop.f32.mrb[0].mxu0
    %v458 = vadd.f32 %v111, %v457
    %459 = vmatprep.mubr.bf16.mxu0 0
    %460 = vmatmul.mubr.bf16.gmra.mrb[0].mxu0 %v294
    %v461 = vpop.f32.mrb[0].mxu0
    %v462 = vadd.f32 %v107, %v461
    %v463 = vpop.f32.mrb[0].mxu0
    %v464 = vadd.f32 %v111, %v463
    %v465 = vpop.f32.mrb[0].mxu0
    %v466 = vadd.f32 %v107, %v465
    %v467 = vpop.f32.mrb[0].mxu0
    %v468 = vadd.f32 %v111, %v467
    %469 = vmatprep.mubr.bf16.mxu0 0
    %470 = vmatmul.mubr.bf16.gmra.mrb[0].mxu0 %v297
    %v471 = vpop.f32.mrb[0].mxu0
    %v472 = vadd.f32 %v107, %v471
    %v473 = vpop.f32.mrb[0].mxu0
    %v474 = vadd.f32 %v111, %v473
    %v475 = vpop.f32.mrb[0].mxu0
    %v476 = vadd.f32 %v107, %v475
    %v477 = vpop.f32.mrb[0].mxu0
    %v478 = vadd.f32 %v111, %v477
    %479 = vmatprep.mubr.bf16.mxu0 0
    %480 = vmatmul.mubr.bf16.gmra.mrb[0].mxu0 %v300
    %v481 = vpop.f32.mrb[0].mxu0
    %v482 = vadd.f32 %v107, %v481
    %v483 = vpop.f32.mrb[0].mxu0
    %v484 = vadd.f32 %v111, %v483
    %v485 = vpop.f32.mrb[0].mxu0
    %v486 = vadd.f32 %v107, %v485
    %v487 = vpop.f32.mrb[0].mxu0
    %v488 = vadd.f32 %v111, %v487
    %489 = vmatprep.mubr.bf16.mxu0 0
    %490 = vmatmul.mubr.bf16.gmra.mrb[0].mxu0 %v303
    %v491 = vpop.f32.mrb[0].mxu0
    %v492 = vadd.f32 %v107, %v491
    %v493 = vpop.f32.mrb[0].mxu0
    %v494 = vadd.f32 %v111, %v493
    %v495 = vpop.f32.mrb[0].mxu0
    %v496 = vadd.f32 %v107, %v495
    %v497 = vpop.f32.mrb[0].mxu0
    %v498 = vadd.f32 %v111, %v497
    %499 = vmatprep.mubr.bf16.mxu0 0
    %500 = vmatmul.mubr.bf16.gmra.mrb[0].mxu0 %v306
    %v501 = vpop.f32.mrb[0].mxu0
    %v502 = vadd.f32 %v107, %v501
    %v503 = vpop.f32.mrb[0].mxu0
    %v504 = vadd.f32 %v111, %v503
    %v505 = vpop.f32.mrb[0].mxu0
    %v506 = vadd.f32 %v107, %v505
    %v507 = vpop.f32.mrb[0].mxu0
    %v508 = vadd.f32 %v111, %v507
    %509 = vmatprep.mubr.bf16.mxu0 0
    %510 = vmatmul.mubr.bf16.gmra.mrb[0].mxu0 %v309
    %v511 = vpop.f32.mrb[0].mxu0
    %v512 = vadd.f32 %v107, %v511
    %v513 = vpop.f32.mrb[0].mxu0
    %v514 = vadd.f32 %v111, %v513
    %v515 = vpop.f32.mrb[0].mxu0
    %v516 = vadd.f32 %v107, %v515
    %v517 = vpop.f32.mrb[0].mxu0
    %v518 = vadd.f32 %v111, %v517
    %519 = vmatprep.mubr.bf16.mxu0 0
    %520 = vmatmul.mubr.bf16.gmra.mrb[0].mxu0 %v312
    %v521 = vpop.f32.mrb[0].mxu0
    %v522 = vadd.f32 %v107, %v521
    %v523 = vpop.f32.mrb[0].mxu0
    %v524 = vadd.f32 %v111, %v523
    %v525 = vpop.f32.mrb[0].mxu0
    %v526 = vadd.f32 %v107, %v525
    %v527 = vpop.f32.mrb[0].mxu0
    %v528 = vadd.f32 %v111, %v527
    %529 = vmatprep.mubr.bf16.mxu0 0
    %530 = vmatmul.mubr.bf16.gmra.mrb[0].mxu0 %v315
    %v531 = vpop.f32.mrb[0].mxu0
    %v532 = vadd.f32 %v107, %v531
    %v533 = vpop.f32.mrb[0].mxu0
    %v534 = vadd.f32 %v111, %v533
    %v535 = vpop.f32.mrb[0].mxu0
    %v536 = vadd.f32 %v107, %v535
    %v537 = vpop.f32.mrb[0].mxu0
    %v538 = vadd.f32 %v111, %v537
    %539 = vdwg.mxu0
    %540 = vmatprep.subr.bf16.mxu0 %v246
    %541 = vmatpush1.bf16.msra.mxu0 %v245
    %542 = vmatprep.subr.bf16.mxu0 %v250
    %543 = vmatpush1.bf16.msra.mxu0 %v249
    %544 = vmatprep.subr.bf16.mxu0 0
    %545 = vmatpush1.bf16.msra.mxu0 0
    %546 = vmatprep.subr.bf16.mxu0 0
    %547 = vmatpush1.bf16.msra.mxu0 0
    %548 = vmatprep.subr.bf16.mxu0 0
    %549 = vmatpush1.bf16.msra.mxu0 0
    %550 = vmatprep.subr.bf16.mxu0 0
    %551 = vmatpush1.bf16.msra.mxu0 0
    %552 = vmatprep.subr.bf16.mxu0 0
    %553 = vmatpush1.bf16.msra.mxu0 0
    %554 = vmatprep.subr.bf16.mxu0 0
    %555 = vmatpush1.bf16.msra.mxu0 0
    %556 = vmatprep.subr.bf16.mxu0 0
    %557 = vmatpush1.bf16.msra.mxu0 0
    %558 = vmatprep.subr.bf16.mxu0 0
    %559 = vmatpush1.bf16.msra.mxu0 0
    %560 = vmatprep.subr.bf16.mxu0 0
    %561 = vmatpush1.bf16.msra.mxu0 0
    %562 = vmatprep.subr.bf16.mxu0 0
    %563 = vmatpush1.bf16.msra.mxu0 0
    %564 = vmatprep.subr.bf16.mxu0 0
    %565 = vmatpush1.bf16.msra.mxu0 0
    %566 = vmatprep.subr.bf16.mxu0 0
    %567 = vmatpush1.bf16.msra.mxu0 0
    %568 = vmatprep.subr.bf16.mxu0 0
    %569 = vmatpush1.bf16.msra.mxu0 0
    %570 = vmatprep.subr.bf16.mxu0 0
    %571 = vmatpush1.bf16.msra.mxu0 0
    %572 = vmatprep.mubr.bf16.mxu0 0
    %573 = vmatmul.mubr.bf16.gmra.mrb[0].mxu0 %v261
    %v574 = vpop.f32.mrb[0].mxu0
    %v575 = vadd.f32 %v115, %v574
    %v576 = vpop.f32.mrb[0].mxu0
    %v577 = vadd.f32 %v119, %v576
    %v578 = vpop.f32.mrb[0].mxu0
    %v579 = vadd.f32 %v115, %v578
    %v580 = vpop.f32.mrb[0].mxu0
    %v581 = vadd.f32 %v119, %v580
    %582 = vmatprep.mubr.bf16.mxu0 0
    %583 = vmatmul.mubr.bf16.gmra.mrb[0].mxu0 %v264
    %v584 = vpop.f32.mrb[0].mxu0
    %v585 = vadd.f32 %v115, %v584
    %v586 = vpop.f32.mrb[0].mxu0
    %v587 = vadd.f32 %v119, %v586
    %v588 = vpop.f32.mrb[0].mxu0
    %v589 = vadd.f32 %v115, %v588
    %v590 = vpop.f32.mrb[0].mxu0
    %v591 = vadd.f32 %v119, %v590
    %592 = vmatprep.mubr.bf16.mxu0 0
    %593 = vmatmul.mubr.bf16.gmra.mrb[0].mxu0 %v267
    %v594 = vpop.f32.mrb[0].mxu0
    %v595 = vadd.f32 %v115, %v594
    %v596 = vpop.f32.mrb[0].mxu0
    %v597 = vadd.f32 %v119, %v596
    %v598 = vpop.f32.mrb[0].mxu0
    %v599 = vadd.f32 %v115, %v598
    %v600 = vpop.f32.mrb[0].mxu0
    %v601 = vadd.f32 %v119, %v600
    %602 = vmatprep.mubr.bf16.mxu0 0
    %603 = vmatmul.mubr.bf16.gmra.mrb[0].mxu0 %v270
    %v604 = vpop.f32.mrb[0].mxu0
    %v605 = vadd.f32 %v115, %v604
    %v606 = vpop.f32.mrb[0].mxu0
    %v607 = vadd.f32 %v119, %v606
    %v608 = vpop.f32.mrb[0].mxu0
    %v609 = vadd.f32 %v115, %v608
    %v610 = vpop.f32.mrb[0].mxu0
    %v611 = vadd.f32 %v119, %v610
    %612 = vmatprep.mubr.bf16.mxu0 0
    %613 = vmatmul.mubr.bf16.gmra.mrb[0].mxu0 %v273
    %v614 = vpop.f32.mrb[0].mxu0
    %v615 = vadd.f32 %v115, %v614
    %v616 = vpop.f32.mrb[0].mxu0
    %v617 = vadd.f32 %v119, %v616
    %v618 = vpop.f32.mrb[0].mxu0
    %v619 = vadd.f32 %v115, %v618
    %v620 = vpop.f32.mrb[0].mxu0
    %v621 = vadd.f32 %v119, %v620
    %622 = vmatprep.mubr.bf16.mxu0 0
    %623 = vmatmul.mubr.bf16.gmra.mrb[0].mxu0 %v276
    %v624 = vpop.f32.mrb[0].mxu0
    %v625 = vadd.f32 %v115, %v624
    %v626 = vpop.f32.mrb[0].mxu0
    %v627 = vadd.f32 %v119, %v626
    %v628 = vpop.f32.mrb[0].mxu0
    %v629 = vadd.f32 %v115, %v628
    %v630 = vpop.f32.mrb[0].mxu0
    %v631 = vadd.f32 %v119, %v630
    %632 = vmatprep.mubr.bf16.mxu0 0
    %633 = vmatmul.mubr.bf16.gmra.mrb[0].mxu0 %v279
    %v634 = vpop.f32.mrb[0].mxu0
    %v635 = vadd.f32 %v115, %v634
    %v636 = vpop.f32.mrb[0].mxu0
    %v637 = vadd.f32 %v119, %v636
    %v638 = vpop.f32.mrb[0].mxu0
    %v639 = vadd.f32 %v115, %v638
    %v640 = vpop.f32.mrb[0].mxu0
    %v641 = vadd.f32 %v119, %v640
    %642 = vmatprep.mubr.bf16.mxu0 0
    %643 = vmatmul.mubr.bf16.gmra.mrb[0].mxu0 %v282
    %v644 = vpop.f32.mrb[0].mxu0
    %v645 = vadd.f32 %v115, %v644
    %v646 = vpop.f32.mrb[0].mxu0
    %v647 = vadd.f32 %v119, %v646
    %v648 = vpop.f32.mrb[0].mxu0
    %v649 = vadd.f32 %v115, %v648
    %v650 = vpop.f32.mrb[0].mxu0
    %v651 = vadd.f32 %v119, %v650
    %652 = vmatprep.mubr.bf16.mxu0 0
    %653 = vmatmul.mubr.bf16.gmra.mrb[0].mxu0 %v285
    %v654 = vpop.f32.mrb[0].mxu0
    %v655 = vadd.f32 %v115, %v654
    %v656 = vpop.f32.mrb[0].mxu0
    %v657 = vadd.f32 %v119, %v656
    %v658 = vpop.f32.mrb[0].mxu0
    %v659 = vadd.f32 %v115, %v658
    %v660 = vpop.f32.mrb[0].mxu0
    %v661 = vadd.f32 %v119, %v660
    %662 = vmatprep.mubr.bf16.mxu0 0
    %663 = vmatmul.mubr.bf16.gmra.mrb[0].mxu0 %v288
    %v664 = vpop.f32.mrb[0].mxu0
    %v665 = vadd.f32 %v115, %v664
    %v666 = vpop.f32.mrb[0].mxu0
    %v667 = vadd.f32 %v119, %v666
    %v668 = vpop.f32.mrb[0].mxu0
    %v669 = vadd.f32 %v115, %v668
    %v670 = vpop.f32.mrb[0].mxu0
    %v671 = vadd.f32 %v119, %v670
    %672 = vmatprep.mubr.bf16.mxu0 0
    %673 = vmatmul.mubr.bf16.gmra.mrb[0].mxu0 %v291
    %v674 = vpop.f32.mrb[0].mxu0
    %v675 = vadd.f32 %v115, %v674
    %v676 = vpop.f32.mrb[0].mxu0
    %v677 = vadd.f32 %v119, %v676
    %v678 = vpop.f32.mrb[0].mxu0
    %v679 = vadd.f32 %v115, %v678
    %v680 = vpop.f32.mrb[0].mxu0
    %v681 = vadd.f32 %v119, %v680
    %682 = vmatprep.mubr.bf16.mxu0 0
    %683 = vmatmul.mubr.bf16.gmra.mrb[0].mxu0 %v294
    %v684 = vpop.f32.mrb[0].mxu0
    %v685 = vadd.f32 %v115, %v684
    %v686 = vpop.f32.mrb[0].mxu0
    %v687 = vadd.f32 %v119, %v686
    %v688 = vpop.f32.mrb[0].mxu0
    %v689 = vadd.f32 %v115, %v688
    %v690 = vpop.f32.mrb[0].mxu0
    %v691 = vadd.f32 %v119, %v690
    %692 = vmatprep.mubr.bf16.mxu0 0
    %693 = vmatmul.mubr.bf16.gmra.mrb[0].mxu0 %v297
    %v694 = vpop.f32.mrb[0].mxu0
    %v695 = vadd.f32 %v115, %v694
    %v696 = vpop.f32.mrb[0].mxu0
    %v697 = vadd.f32 %v119, %v696
    %v698 = vpop.f32.mrb[0].mxu0
    %v699 = vadd.f32 %v115, %v698
    %v700 = vpop.f32.mrb[0].mxu0
    %v701 = vadd.f32 %v119, %v700
    %702 = vmatprep.mubr.bf16.mxu0 0
    %703 = vmatmul.mubr.bf16.gmra.mrb[0].mxu0 %v300
    %v704 = vpop.f32.mrb[0].mxu0
    %v705 = vadd.f32 %v115, %v704
    %v706 = vpop.f32.mrb[0].mxu0
    %v707 = vadd.f32 %v119, %v706
    %v708 = vpop.f32.mrb[0].mxu0
    %v709 = vadd.f32 %v115, %v708
    %v710 = vpop.f32.mrb[0].mxu0
    %v711 = vadd.f32 %v119, %v710
    %712 = vmatprep.mubr.bf16.mxu0 0
    %713 = vmatmul.mubr.bf16.gmra.mrb[0].mxu0 %v303
    %v714 = vpop.f32.mrb[0].mxu0
    %v715 = vadd.f32 %v115, %v714
    %v716 = vpop.f32.mrb[0].mxu0
    %v717 = vadd.f32 %v119, %v716
    %v718 = vpop.f32.mrb[0].mxu0
    %v719 = vadd.f32 %v115, %v718
    %v720 = vpop.f32.mrb[0].mxu0
    %v721 = vadd.f32 %v119, %v720
    %722 = vmatprep.mubr.bf16.mxu0 0
    %723 = vmatmul.mubr.bf16.gmra.mrb[0].mxu0 %v306
    %v724 = vpop.f32.mrb[0].mxu0
    %v725 = vadd.f32 %v115, %v724
    %v726 = vpop.f32.mrb[0].mxu0
    %v727 = vadd.f32 %v119, %v726
    %v728 = vpop.f32.mrb[0].mxu0
    %v729 = vadd.f32 %v115, %v728
    %v730 = vpop.f32.mrb[0].mxu0
    %v731 = vadd.f32 %v119, %v730
    %732 = vmatprep.mubr.bf16.mxu0 0
    %733 = vmatmul.mubr.bf16.gmra.mrb[0].mxu0 %v309
    %v734 = vpop.f32.mrb[0].mxu0
    %v735 = vadd.f32 %v115, %v734
    %v736 = vpop.f32.mrb[0].mxu0
    %v737 = vadd.f32 %v119, %v736
    %v738 = vpop.f32.mrb[0].mxu0
    %v739 = vadd.f32 %v115, %v738
    %v740 = vpop.f32.mrb[0].mxu0
    %v741 = vadd.f32 %v119, %v740
    %742 = vmatprep.mubr.bf16.mxu0 0
    %743 = vmatmul.mubr.bf16.gmra.mrb[0].mxu0 %v312
    %v744 = vpop.f32.mrb[0].mxu0
    %v745 = vadd.f32 %v115, %v744
    %v746 = vpop.f32.mrb[0].mxu0
    %v747 = vadd.f32 %v119, %v746
    %v748 = vpop.f32.mrb[0].mxu0
    %v749 = vadd.f32 %v115, %v748
    %v750 = vpop.f32.mrb[0].mxu0
    %v751 = vadd.f32 %v119, %v750
    %752 = vmatprep.mubr.bf16.mxu0 0
    %753 = vmatmul.mubr.bf16.gmra.mrb[0].mxu0 %v315
    %v754 = vpop.f32.mrb[0].mxu0
    %v755 = vadd.f32 %v115, %v754
    %v756 = vpop.f32.mrb[0].mxu0
    %v757 = vadd.f32 %v119, %v756
    %v758 = vpop.f32.mrb[0].mxu0
    %v759 = vadd.f32 %v115, %v758
    %v760 = vpop.f32.mrb[0].mxu0
    %v761 = vadd.f32 %v119, %v760
    %762 = vdwg.mxu0
    %v763 = vmax.f32 %v352, 0.0
    %v764 = vmax.f32 %v354, 0.0
    %v765 = vmax.f32 %v575, 0.0
    %v766 = vmax.f32 %v577, 0.0
    %v767 = vmax.f32 %v356, 0.0
    %v768 = vmax.f32 %v358, 0.0
    %v769 = vmax.f32 %v579, 0.0
    %v770 = vmax.f32 %v581, 0.0
    %v771 = vmax.f32 %v362, 0.0
    %v772 = vmax.f32 %v364, 0.0
    %v773 = vmax.f32 %v585, 0.0
    %v774 = vmax.f32 %v587, 0.0
    %v775 = vmax.f32 %v366, 0.0
    %v776 = vmax.f32 %v368, 0.0
    %v777 = vmax.f32 %v589, 0.0
    %v778 = vmax.f32 %v591, 0.0
    %v779 = vmax.f32 %v372, 0.0
    %v780 = vmax.f32 %v374, 0.0
    %v781 = vmax.f32 %v595, 0.0
    %v782 = vmax.f32 %v597, 0.0
    %v783 = vmax.f32 %v376, 0.0
    %v784 = vmax.f32 %v378, 0.0
    %v785 = vmax.f32 %v599, 0.0
    %v786 = vmax.f32 %v601, 0.0
    %v787 = vmax.f32 %v382, 0.0
    %v788 = vmax.f32 %v384, 0.0
    %v789 = vmax.f32 %v605, 0.0
    %v790 = vmax.f32 %v607, 0.0
    %v791 = vmax.f32 %v386, 0.0
    %v792 = vmax.f32 %v388, 0.0
    %v793 = vmax.f32 %v609, 0.0
    %v794 = vmax.f32 %v611, 0.0
    %v795 = vmax.f32 %v392, 0.0
    %v796 = vmax.f32 %v394, 0.0
    %v797 = vmax.f32 %v615, 0.0
    %v798 = vmax.f32 %v617, 0.0
    %v799 = vmax.f32 %v396, 0.0
    %v800 = vmax.f32 %v398, 0.0
    %v801 = vmax.f32 %v619, 0.0
    %v802 = vmax.f32 %v621, 0.0
    %v803 = vmax.f32 %v402, 0.0
    %v804 = vmax.f32 %v404, 0.0
    %v805 = vmax.f32 %v625, 0.0
    %v806 = vmax.f32 %v627, 0.0
    %v807 = vmax.f32 %v406, 0.0
    %v808 = vmax.f32 %v408, 0.0
    %v809 = vmax.f32 %v629, 0.0
    %v810 = vmax.f32 %v631, 0.0
    %v811 = vmax.f32 %v412, 0.0
    %v812 = vmax.f32 %v414, 0.0
    %v813 = vmax.f32 %v635, 0.0
    %v814 = vmax.f32 %v637, 0.0
    %v815 = vmax.f32 %v416, 0.0
    %v816 = vmax.f32 %v418, 0.0
    %v817 = vmax.f32 %v639, 0.0
    %v818 = vmax.f32 %v641, 0.0
    %v819 = vmax.f32 %v422, 0.0
    %v820 = vmax.f32 %v424, 0.0
    %v821 = vmax.f32 %v645, 0.0
    %v822 = vmax.f32 %v647, 0.0
    %v823 = vmax.f32 %v426, 0.0
    %v824 = vmax.f32 %v428, 0.0
    %v825 = vmax.f32 %v649, 0.0
    %v826 = vmax.f32 %v651, 0.0
    %v827 = vmax.f32 %v432, 0.0
    %v828 = vmax.f32 %v434, 0.0
    %v829 = vmax.f32 %v655, 0.0
    %v830 = vmax.f32 %v657, 0.0
    %v831 = vmax.f32 %v436, 0.0
    %v832 = vmax.f32 %v438, 0.0
    %v833 = vmax.f32 %v659, 0.0
    %v834 = vmax.f32 %v661, 0.0
    %v835 = vmax.f32 %v442, 0.0
    %v836 = vmax.f32 %v444, 0.0
    %v837 = vmax.f32 %v665, 0.0
    %v838 = vmax.f32 %v667, 0.0
    %v839 = vmax.f32 %v446, 0.0
    %v840 = vmax.f32 %v448, 0.0
    %v841 = vmax.f32 %v669, 0.0
    %v842 = vmax.f32 %v671, 0.0
    %v843 = vmax.f32 %v452, 0.0
    %v844 = vmax.f32 %v454, 0.0
    %v845 = vmax.f32 %v675, 0.0
    %v846 = vmax.f32 %v677, 0.0
    %v847 = vmax.f32 %v456, 0.0
    %v848 = vmax.f32 %v458, 0.0
    %v849 = vmax.f32 %v679, 0.0
    %v850 = vmax.f32 %v681, 0.0
    %v851 = vmax.f32 %v462, 0.0
    %v852 = vmax.f32 %v464, 0.0
    %v853 = vmax.f32 %v685, 0.0
    %v854 = vmax.f32 %v687, 0.0
    %v855 = vmax.f32 %v466, 0.0
    %v856 = vmax.f32 %v468, 0.0
    %v857 = vmax.f32 %v689, 0.0
    %v858 = vmax.f32 %v691, 0.0
    %v859 = vmax.f32 %v472, 0.0
    %v860 = vmax.f32 %v474, 0.0
    %v861 = vmax.f32 %v695, 0.0
    %v862 = vmax.f32 %v697, 0.0
    %v863 = vmax.f32 %v476, 0.0
    %v864 = vmax.f32 %v478, 0.0
    %v865 = vmax.f32 %v699, 0.0
    %v866 = vmax.f32 %v701, 0.0
    %v867 = vmax.f32 %v482, 0.0
    %v868 = vmax.f32 %v484, 0.0
    %v869 = vmax.f32 %v705, 0.0
    %v870 = vmax.f32 %v707, 0.0
    %v871 = vmax.f32 %v486, 0.0
    %v872 = vmax.f32 %v488, 0.0
    %v873 = vmax.f32 %v709, 0.0
    %v874 = vmax.f32 %v711, 0.0
    %v875 = vmax.f32 %v492, 0.0
    %v876 = vmax.f32 %v494, 0.0
    %v877 = vmax.f32 %v715, 0.0
    %v878 = vmax.f32 %v717, 0.0
    %v879 = vmax.f32 %v496, 0.0
    %v880 = vmax.f32 %v498, 0.0
    %v881 = vmax.f32 %v719, 0.0
    %v882 = vmax.f32 %v721, 0.0
    %v883 = vmax.f32 %v502, 0.0
    %v884 = vmax.f32 %v504, 0.0
    %v885 = vmax.f32 %v725, 0.0
    %v886 = vmax.f32 %v727, 0.0
    %v887 = vmax.f32 %v506, 0.0
    %v888 = vmax.f32 %v508, 0.0
    %v889 = vmax.f32 %v729, 0.0
    %v890 = vmax.f32 %v731, 0.0
    %v891 = vmax.f32 %v512, 0.0
    %v892 = vmax.f32 %v514, 0.0
    %v893 = vmax.f32 %v735, 0.0
    %v894 = vmax.f32 %v737, 0.0
    %v895 = vmax.f32 %v516, 0.0
    %v896 = vmax.f32 %v518, 0.0
    %v897 = vmax.f32 %v739, 0.0
    %v898 = vmax.f32 %v741, 0.0
    %v899 = vmax.f32 %v522, 0.0
    %v900 = vmax.f32 %v524, 0.0
    %v901 = vmax.f32 %v745, 0.0
    %v902 = vmax.f32 %v747, 0.0
    %v903 = vmax.f32 %v526, 0.0
    %v904 = vmax.f32 %v528, 0.0
    %v905 = vmax.f32 %v749, 0.0
    %v906 = vmax.f32 %v751, 0.0
    %v907 = vmax.f32 %v532, 0.0
    %v908 = vmax.f32 %v534, 0.0
    %v909 = vmax.f32 %v755, 0.0
    %v910 = vmax.f32 %v757, 0.0
    %v911 = vmax.f32 %v536, 0.0
    %v912 = vmax.f32 %v538, 0.0
    %v913 = vmax.f32 %v759, 0.0
    %v914 = vmax.f32 %v761, 0.0
    %v915 = vpack.c.bf16 %v767, %v763
    %v916 = vpack.c.bf16 %v768, %v764
    %v917 = vpack.c.bf16 %v769, %v765
    %v918 = vpack.c.bf16 %v770, %v766
    %v919 = vpack.c.bf16 %v775, %v771
    %v920 = vpack.c.bf16 %v776, %v772
    %v921 = vpack.c.bf16 %v777, %v773
    %v922 = vpack.c.bf16 %v778, %v774
    %v923 = vpack.c.bf16 %v783, %v779
    %v924 = vpack.c.bf16 %v784, %v780
    %v925 = vpack.c.bf16 %v785, %v781
    %v926 = vpack.c.bf16 %v786, %v782
    %v927 = vpack.c.bf16 %v791, %v787
    %v928 = vpack.c.bf16 %v792, %v788
    %v929 = vpack.c.bf16 %v793, %v789
    %v930 = vpack.c.bf16 %v794, %v790
    %v931 = vpack.c.bf16 %v799, %v795
    %v932 = vpack.c.bf16 %v800, %v796
    %v933 = vpack.c.bf16 %v801, %v797
    %v934 = vpack.c.bf16 %v802, %v798
    %v935 = vpack.c.bf16 %v807, %v803
    %v936 = vpack.c.bf16 %v808, %v804
    %v937 = vpack.c.bf16 %v809, %v805
    %v938 = vpack.c.bf16 %v810, %v806
    %v939 = vpack.c.bf16 %v815, %v811
    %v940 = vpack.c.bf16 %v816, %v812
    %v941 = vpack.c.bf16 %v817, %v813
    %v942 = vpack.c.bf16 %v818, %v814
    %v943 = vpack.c.bf16 %v823, %v819
    %v944 = vpack.c.bf16 %v824, %v820
    %v945 = vpack.c.bf16 %v825, %v821
    %v946 = vpack.c.bf16 %v826, %v822
    %v947 = vpack.c.bf16 %v831, %v827
    %v948 = vpack.c.bf16 %v832, %v828
    %v949 = vpack.c.bf16 %v833, %v829
    %v950 = vpack.c.bf16 %v834, %v830
    %v951 = vpack.c.bf16 %v839, %v835
    %v952 = vpack.c.bf16 %v840, %v836
    %v953 = vpack.c.bf16 %v841, %v837
    %v954 = vpack.c.bf16 %v842, %v838
    %v955 = vpack.c.bf16 %v847, %v843
    %v956 = vpack.c.bf16 %v848, %v844
    %v957 = vpack.c.bf16 %v849, %v845
    %v958 = vpack.c.bf16 %v850, %v846
    %v959 = vpack.c.bf16 %v855, %v851
    %v960 = vpack.c.bf16 %v856, %v852
    %v961 = vpack.c.bf16 %v857, %v853
    %v962 = vpack.c.bf16 %v858, %v854
    %v963 = vpack.c.bf16 %v863, %v859
    %v964 = vpack.c.bf16 %v864, %v860
    %v965 = vpack.c.bf16 %v865, %v861
    %v966 = vpack.c.bf16 %v866, %v862
    %v967 = vpack.c.bf16 %v871, %v867
    %v968 = vpack.c.bf16 %v872, %v868
    %v969 = vpack.c.bf16 %v873, %v869
    %v970 = vpack.c.bf16 %v874, %v870
    %v971 = vpack.c.bf16 %v879, %v875
    %v972 = vpack.c.bf16 %v880, %v876
    %v973 = vpack.c.bf16 %v881, %v877
    %v974 = vpack.c.bf16 %v882, %v878
    %v975 = vpack.c.bf16 %v887, %v883
    %v976 = vpack.c.bf16 %v888, %v884
    %v977 = vpack.c.bf16 %v889, %v885
    %v978 = vpack.c.bf16 %v890, %v886
    %v979 = vpack.c.bf16 %v895, %v891
    %v980 = vpack.c.bf16 %v896, %v892
    %v981 = vpack.c.bf16 %v897, %v893
    %v982 = vpack.c.bf16 %v898, %v894
    %v983 = vpack.c.bf16 %v903, %v899
    %v984 = vpack.c.bf16 %v904, %v900
    %v985 = vpack.c.bf16 %v905, %v901
    %v986 = vpack.c.bf16 %v906, %v902
    %v987 = vpack.c.bf16 %v911, %v907
    %v988 = vpack.c.bf16 %v912, %v908
    %v989 = vpack.c.bf16 %v913, %v909
    %v990 = vpack.c.bf16 %v914, %v910
    %v991 = vld [vmem:[#allocation5] sm:$0xff]
    %v992 = vld [vmem:[#allocation5 + $0x8] sm:$0xf]
    %v993 = vld [vmem:[#allocation5 + $0xc] sm:$0xff]
    %v994 = vld [vmem:[#allocation5 + $0x14] sm:$0xf]
    %v995 = vld [vmem:[#allocation5 + $0x18] sm:$0xff]
    %v996 = vld [vmem:[#allocation5 + $0x20] sm:$0xf]
    %v997 = vld [vmem:[#allocation5 + $0x24] sm:$0xff]
    %v998 = vld [vmem:[#allocation5 + $0x2c] sm:$0xf]
    %v999 = vld [vmem:[#allocation5 + $0x30] sm:$0xff]
    %v1000 = vld [vmem:[#allocation5 + $0x38] sm:$0xf]
    %v1001 = vld [vmem:[#allocation5 + $0x3c] sm:$0xff]
    %v1002 = vld [vmem:[#allocation5 + $0x44] sm:$0xf]
    %v1003 = vld [vmem:[#allocation5 + $0x48] sm:$0xff]
    %v1004 = vld [vmem:[#allocation5 + $0x50] sm:$0xf]
    %v1005 = vld [vmem:[#allocation5 + $0x54] sm:$0xff]
    %v1006 = vld [vmem:[#allocation5 + $0x5c] sm:$0xf]
    %v1007 = vld [vmem:[#allocation5 + $0x60] sm:$0xff]
    %v1008 = vld [vmem:[#allocation5 + $0x68] sm:$0xf]
    %v1009 = vld [vmem:[#allocation5 + $0x6c] sm:$0xff]
    %v1010 = vld [vmem:[#allocation5 + $0x74] sm:$0xf]
    %v1011 = vld [vmem:[#allocation5 + $0x78] sm:$0xff]
    %v1012 = vld [vmem:[#allocation5 + $0x80] sm:$0xf]
    %v1013 = vld [vmem:[#allocation5 + $0x84] sm:$0xff]
    %v1014 = vld [vmem:[#allocation5 + $0x8c] sm:$0xf]
    %v1015 = vld [vmem:[#allocation5 + $0x90] sm:$0xff]
    %v1016 = vld [vmem:[#allocation5 + $0x98] sm:$0xf]
    %v1017 = vld [vmem:[#allocation5 + $0x9c] sm:$0xff]
    %v1018 = vld [vmem:[#allocation5 + $0xa4] sm:$0xf]
    %v1019 = vld [vmem:[#allocation5 + $0xa8] sm:$0xff]
    %v1020 = vld [vmem:[#allocation5 + $0xb0] sm:$0xf]
    %v1021 = vld [vmem:[#allocation5 + $0xb4] sm:$0xff]
    %v1022 = vld [vmem:[#allocation5 + $0xbc] sm:$0xf]
    %v1023 = vld [vmem:[#allocation5 + $0xc0] sm:$0xff]
    %v1024 = vld [vmem:[#allocation5 + $0xc8] sm:$0xf]
    %v1025 = vld [vmem:[#allocation5 + $0xcc] sm:$0xff]
    %v1026 = vld [vmem:[#allocation5 + $0xd4] sm:$0xf]
    %v1027 = vld [vmem:[#allocation5 + $0xd8] sm:$0xff]
    %v1028 = vld [vmem:[#allocation5 + $0xe0] sm:$0xf]
    %v1029 = vld [vmem:[#allocation5 + $0xe4] sm:$0xff]
    %v1030 = vld [vmem:[#allocation5 + $0xec] sm:$0xf]
    %v1031 = vld [vmem:[#allocation5 + $0xf0] sm:$0xff]
    %v1032 = vld [vmem:[#allocation5 + $0xf8] sm:$0xf]
    %v1033 = vld [vmem:[#allocation5 + $0xfc] sm:$0xff]
    %v1034 = vld [vmem:[#allocation5 + $0x104] sm:$0xf]
    %v1035 = vld [vmem:[#allocation5 + $0x108] sm:$0xff]
    %v1036 = vld [vmem:[#allocation5 + $0x110] sm:$0xf]
    %v1037 = vld [vmem:[#allocation5 + $0x114] sm:$0xff]
    %v1038 = vld [vmem:[#allocation5 + $0x11c] sm:$0xf]
    %v1039 = vld [vmem:[#allocation5 + $0x120] sm:$0xff]
    %v1040 = vld [vmem:[#allocation5 + $0x128] sm:$0xf]
    %v1041 = vld [vmem:[#allocation5 + $0x12c] sm:$0xff]
    %v1042 = vld [vmem:[#allocation5 + $0x134] sm:$0xf]
    %v1043 = vld [vmem:[#allocation5 + $0x138] sm:$0xff]
    %v1044 = vld [vmem:[#allocation5 + $0x140] sm:$0xf]
    %v1045 = vld [vmem:[#allocation5 + $0x144] sm:$0xff]
    %v1046 = vld [vmem:[#allocation5 + $0x14c] sm:$0xf]
    %v1047 = vld [vmem:[#allocation5 + $0x150] sm:$0xff]
    %v1048 = vld [vmem:[#allocation5 + $0x158] sm:$0xf]
    %v1049 = vld [vmem:[#allocation5 + $0x15c] sm:$0xff]
    %v1050 = vld [vmem:[#allocation5 + $0x164] sm:$0xf]
    %v1051 = vld [vmem:[#allocation5 + $0x168] sm:$0xff]
    %v1052 = vld [vmem:[#allocation5 + $0x170] sm:$0xf]
    %v1053 = vld [vmem:[#allocation5 + $0x174] sm:$0xff]
    %v1054 = vld [vmem:[#allocation5 + $0x17c] sm:$0xf]
    %v1055 = vld [vmem:[#allocation5 + $0x180] sm:$0xff]
    %v1056 = vld [vmem:[#allocation5 + $0x188] sm:$0xf]
    %v1057 = vld [vmem:[#allocation5 + $0x18c] sm:$0xff]
    %v1058 = vld [vmem:[#allocation5 + $0x194] sm:$0xf]
    %v1059 = vld [vmem:[#allocation5 + $0x198] sm:$0xff]
    %v1060 = vld [vmem:[#allocation5 + $0x1a0] sm:$0xf]
    %v1061 = vld [vmem:[#allocation5 + $0x1a4] sm:$0xff]
    %v1062 = vld [vmem:[#allocation5 + $0x1ac] sm:$0xf]
    %v1063 = vld [vmem:[#allocation5 + $0x1b0] sm:$0xff]
    %v1064 = vld [vmem:[#allocation5 + $0x1b8] sm:$0xf]
    %v1065 = vld [vmem:[#allocation5 + $0x1bc] sm:$0xff]
    %v1066 = vld [vmem:[#allocation5 + $0x1c4] sm:$0xf]
    %v1067 = vld [vmem:[#allocation5 + $0x1c8] sm:$0xff]
    %v1068 = vld [vmem:[#allocation5 + $0x1d0] sm:$0xf]
    %v1069 = vld [vmem:[#allocation5 + $0x1d4] sm:$0xff]
    %v1070 = vld [vmem:[#allocation5 + $0x1dc] sm:$0xf]
    %v1071 = vld [vmem:[#allocation5 + $0x1e0] sm:$0xff]
    %v1072 = vld [vmem:[#allocation5 + $0x1e8] sm:$0xf]
    %v1073 = vld [vmem:[#allocation5 + $0x1ec] sm:$0xff]
    %v1074 = vld [vmem:[#allocation5 + $0x1f4] sm:$0xf]
    %v1075 = vld [vmem:[#allocation5 + $0x1f8] sm:$0xff]
    %v1076 = vld [vmem:[#allocation5 + $0x200] sm:$0xf]
    %v1077 = vld [vmem:[#allocation5 + $0x204] sm:$0xff]
    %v1078 = vld [vmem:[#allocation5 + $0x20c] sm:$0xf]
    %v1079 = vld [vmem:[#allocation5 + $0x210] sm:$0xff]
    %v1080 = vld [vmem:[#allocation5 + $0x218] sm:$0xf]
    %v1081 = vld [vmem:[#allocation5 + $0x21c] sm:$0xff]
    %v1082 = vld [vmem:[#allocation5 + $0x224] sm:$0xf]
    %v1083 = vld [vmem:[#allocation5 + $0x228] sm:$0xff]
    %v1084 = vld [vmem:[#allocation5 + $0x230] sm:$0xf]
    %v1085 = vld [vmem:[#allocation5 + $0x234] sm:$0xff]
    %v1086 = vld [vmem:[#allocation5 + $0x23c] sm:$0xf]
    %v1087 = vld [vmem:[#allocation5 + $0x240] sm:$0xff]
    %v1088 = vld [vmem:[#allocation5 + $0x248] sm:$0xf]
    %v1089 = vld [vmem:[#allocation5 + $0x24c] sm:$0xff]
    %v1090 = vld [vmem:[#allocation5 + $0x254] sm:$0xf]
    %v1091 = vld [vmem:[#allocation5 + $0x258] sm:$0xff]
    %v1092 = vld [vmem:[#allocation5 + $0x260] sm:$0xf]
    %v1093 = vld [vmem:[#allocation5 + $0x264] sm:$0xff]
    %v1094 = vld [vmem:[#allocation5 + $0x26c] sm:$0xf]
    %v1095 = vld [vmem:[#allocation5 + $0x270] sm:$0xff]
    %v1096 = vld [vmem:[#allocation5 + $0x278] sm:$0xf]
    %v1097 = vld [vmem:[#allocation5 + $0x27c] sm:$0xff]
    %v1098 = vld [vmem:[#allocation5 + $0x284] sm:$0xf]
    %v1099 = vld [vmem:[#allocation5 + $0x288] sm:$0xff]
    %v1100 = vld [vmem:[#allocation5 + $0x290] sm:$0xf]
    %v1101 = vld [vmem:[#allocation5 + $0x294] sm:$0xff]
    %v1102 = vld [vmem:[#allocation5 + $0x29c] sm:$0xf]
    %v1103 = vld [vmem:[#allocation5 + $0x2a0] sm:$0xff]
    %v1104 = vld [vmem:[#allocation5 + $0x2a8] sm:$0xf]
    %v1105 = vld [vmem:[#allocation5 + $0x2ac] sm:$0xff]
    %v1106 = vld [vmem:[#allocation5 + $0x2b4] sm:$0xf]
    %v1107 = vld [vmem:[#allocation5 + $0x2b8] sm:$0xff]
    %v1108 = vld [vmem:[#allocation5 + $0x2c0] sm:$0xf]
    %v1109 = vld [vmem:[#allocation5 + $0x2c4] sm:$0xff]
    %v1110 = vld [vmem:[#allocation5 + $0x2cc] sm:$0xf]
    %v1111 = vld [vmem:[#allocation5 + $0x2d0] sm:$0xff]
    %v1112 = vld [vmem:[#allocation5 + $0x2d8] sm:$0xf]
    %v1113 = vld [vmem:[#allocation5 + $0x2dc] sm:$0xff]
    %v1114 = vld [vmem:[#allocation5 + $0x2e4] sm:$0xf]
    %v1115 = vld [vmem:[#allocation5 + $0x2e8] sm:$0xff]
    %v1116 = vld [vmem:[#allocation5 + $0x2f0] sm:$0xf]
    %v1117 = vld [vmem:[#allocation5 + $0x2f4] sm:$0xff]
    %v1118 = vld [vmem:[#allocation5 + $0x2fc] sm:$0xf]
    %v1119 = vld [vmem:[%s4] sm:$0x7]
    %v1121 = vlaneseq
    %v1122 = vshrl.u32 %v1121, 7
    %v1123 = vsub.s32 0, %v1122
    %v1124 = vrot.slane %v1119, %v1123
    %v1125 = vlaneseq
    %v1126 = vshrl.u32 %v1125, 7
    %v1127 = vsub.s32 1, %v1126
    %v1128 = vrot.slane %v1119, %v1127
    %v1129 = vlaneseq
    %v1130 = vshrl.u32 %v1129, 7
    %v1131 = vsub.s32 2, %v1130
    %v1132 = vrot.slane %v1119, %v1131
    %v1264 = vunpack.c.l.b16 %v991
    %v1265 = vunpack.c.h.b16 %v991
    %v1266 = vunpack.c.l.b16 %v992
    %v1267 = vunpack.c.l.b16 %v993
    %v1268 = vunpack.c.h.b16 %v993
    %v1269 = vunpack.c.l.b16 %v994
    %v1270 = vunpack.c.l.b16 %v995
    %v1271 = vunpack.c.h.b16 %v995
    %v1272 = vunpack.c.l.b16 %v996
    %v1273 = vunpack.c.l.b16 %v997
    %v1274 = vunpack.c.h.b16 %v997
    %v1275 = vunpack.c.l.b16 %v998
    %v1276 = vunpack.c.l.b16 %v999
    %v1277 = vunpack.c.h.b16 %v999
    %v1278 = vunpack.c.l.b16 %v1000
    %v1279 = vunpack.c.l.b16 %v1001
    %v1280 = vunpack.c.h.b16 %v1001
    %v1281 = vunpack.c.l.b16 %v1002
    %v1282 = vunpack.c.l.b16 %v1003
    %v1283 = vunpack.c.h.b16 %v1003
    %v1284 = vunpack.c.l.b16 %v1004
    %v1285 = vunpack.c.l.b16 %v1005
    %v1286 = vunpack.c.h.b16 %v1005
    %v1287 = vunpack.c.l.b16 %v1006
    %v1288 = vunpack.c.l.b16 %v1007
    %v1289 = vunpack.c.h.b16 %v1007
    %v1290 = vunpack.c.l.b16 %v1008
    %v1291 = vunpack.c.l.b16 %v1009
    %v1292 = vunpack.c.h.b16 %v1009
    %v1293 = vunpack.c.l.b16 %v1010
    %v1294 = vunpack.c.l.b16 %v1011
    %v1295 = vunpack.c.h.b16 %v1011
    %v1296 = vunpack.c.l.b16 %v1012
    %v1297 = vunpack.c.l.b16 %v1013
    %v1298 = vunpack.c.h.b16 %v1013
    %v1299 = vunpack.c.l.b16 %v1014
    %v1300 = vunpack.c.l.b16 %v1015
    %v1301 = vunpack.c.h.b16 %v1015
    %v1302 = vunpack.c.l.b16 %v1016
    %v1303 = vunpack.c.l.b16 %v1017
    %v1304 = vunpack.c.h.b16 %v1017
    %v1305 = vunpack.c.l.b16 %v1018
    %v1306 = vunpack.c.l.b16 %v1019
    %v1307 = vunpack.c.h.b16 %v1019
    %v1308 = vunpack.c.l.b16 %v1020
    %v1309 = vunpack.c.l.b16 %v1021
    %v1310 = vunpack.c.h.b16 %v1021
    %v1311 = vunpack.c.l.b16 %v1022
    %v1312 = vunpack.c.l.b16 %v1023
    %v1313 = vunpack.c.h.b16 %v1023
    %v1314 = vunpack.c.l.b16 %v1024
    %v1315 = vunpack.c.l.b16 %v1025
    %v1316 = vunpack.c.h.b16 %v1025
    %v1317 = vunpack.c.l.b16 %v1026
    %v1318 = vunpack.c.l.b16 %v1027
    %v1319 = vunpack.c.h.b16 %v1027
    %v1320 = vunpack.c.l.b16 %v1028
    %v1321 = vunpack.c.l.b16 %v1029
    %v1322 = vunpack.c.h.b16 %v1029
    %v1323 = vunpack.c.l.b16 %v1030
    %v1324 = vunpack.c.l.b16 %v1031
    %v1325 = vunpack.c.h.b16 %v1031
    %v1326 = vunpack.c.l.b16 %v1032
    %v1327 = vunpack.c.l.b16 %v1033
    %v1328 = vunpack.c.h.b16 %v1033
    %v1329 = vunpack.c.l.b16 %v1034
    %v1330 = vunpack.c.l.b16 %v1035
    %v1331 = vunpack.c.h.b16 %v1035
    %v1332 = vunpack.c.l.b16 %v1036
    %v1333 = vunpack.c.l.b16 %v1037
    %v1334 = vunpack.c.h.b16 %v1037
    %v1335 = vunpack.c.l.b16 %v1038
    %v1336 = vunpack.c.l.b16 %v1039
    %v1337 = vunpack.c.h.b16 %v1039
    %v1338 = vunpack.c.l.b16 %v1040
    %v1339 = vunpack.c.l.b16 %v1041
    %v1340 = vunpack.c.h.b16 %v1041
    %v1341 = vunpack.c.l.b16 %v1042
    %v1342 = vunpack.c.l.b16 %v1043
    %v1343 = vunpack.c.h.b16 %v1043
    %v1344 = vunpack.c.l.b16 %v1044
    %v1345 = vunpack.c.l.b16 %v1045
    %v1346 = vunpack.c.h.b16 %v1045
    %v1347 = vunpack.c.l.b16 %v1046
    %v1348 = vunpack.c.l.b16 %v1047
    %v1349 = vunpack.c.h.b16 %v1047
    %v1350 = vunpack.c.l.b16 %v1048
    %v1351 = vunpack.c.l.b16 %v1049
    %v1352 = vunpack.c.h.b16 %v1049
    %v1353 = vunpack.c.l.b16 %v1050
    %v1354 = vunpack.c.l.b16 %v1051
    %v1355 = vunpack.c.h.b16 %v1051
    %v1356 = vunpack.c.l.b16 %v1052
    %v1357 = vunpack.c.l.b16 %v1053
    %v1358 = vunpack.c.h.b16 %v1053
    %v1359 = vunpack.c.l.b16 %v1054
    %v1360 = vunpack.c.l.b16 %v1055
    %v1361 = vunpack.c.h.b16 %v1055
    %v1362 = vunpack.c.l.b16 %v1056
    %v1363 = vunpack.c.l.b16 %v1057
    %v1364 = vunpack.c.h.b16 %v1057
    %v1365 = vunpack.c.l.b16 %v1058
    %v1366 = vunpack.c.l.b16 %v1059
    %v1367 = vunpack.c.h.b16 %v1059
    %v1368 = vunpack.c.l.b16 %v1060
    %v1369 = vunpack.c.l.b16 %v1061
    %v1370 = vunpack.c.h.b16 %v1061
    %v1371 = vunpack.c.l.b16 %v1062
    %v1372 = vunpack.c.l.b16 %v1063
    %v1373 = vunpack.c.h.b16 %v1063
    %v1374 = vunpack.c.l.b16 %v1064
    %v1375 = vunpack.c.l.b16 %v1065
    %v1376 = vunpack.c.h.b16 %v1065
    %v1377 = vunpack.c.l.b16 %v1066
    %v1378 = vunpack.c.l.b16 %v1067
    %v1379 = vunpack.c.h.b16 %v1067
    %v1380 = vunpack.c.l.b16 %v1068
    %v1381 = vunpack.c.l.b16 %v1069
    %v1382 = vunpack.c.h.b16 %v1069
    %v1383 = vunpack.c.l.b16 %v1070
    %v1384 = vunpack.c.l.b16 %v1071
    %v1385 = vunpack.c.h.b16 %v1071
    %v1386 = vunpack.c.l.b16 %v1072
    %v1387 = vunpack.c.l.b16 %v1073
    %v1388 = vunpack.c.h.b16 %v1073
    %v1389 = vunpack.c.l.b16 %v1074
    %v1390 = vunpack.c.l.b16 %v1075
    %v1391 = vunpack.c.h.b16 %v1075
    %v1392 = vunpack.c.l.b16 %v1076
    %v1393 = vunpack.c.l.b16 %v1077
    %v1394 = vunpack.c.h.b16 %v1077
    %v1395 = vunpack.c.l.b16 %v1078
    %v1396 = vunpack.c.l.b16 %v1079
    %v1397 = vunpack.c.h.b16 %v1079
    %v1398 = vunpack.c.l.b16 %v1080
    %v1399 = vunpack.c.l.b16 %v1081
    %v1400 = vunpack.c.h.b16 %v1081
    %v1401 = vunpack.c.l.b16 %v1082
    %v1402 = vunpack.c.l.b16 %v1083
    %v1403 = vunpack.c.h.b16 %v1083
    %v1404 = vunpack.c.l.b16 %v1084
    %v1405 = vunpack.c.l.b16 %v1085
    %v1406 = vunpack.c.h.b16 %v1085
    %v1407 = vunpack.c.l.b16 %v1086
    %v1408 = vunpack.c.l.b16 %v1087
    %v1409 = vunpack.c.h.b16 %v1087
    %v1410 = vunpack.c.l.b16 %v1088
    %v1411 = vunpack.c.l.b16 %v1089
    %v1412 = vunpack.c.h.b16 %v1089
    %v1413 = vunpack.c.l.b16 %v1090
    %v1414 = vunpack.c.l.b16 %v1091
    %v1415 = vunpack.c.h.b16 %v1091
    %v1416 = vunpack.c.l.b16 %v1092
    %v1417 = vunpack.c.l.b16 %v1093
    %v1418 = vunpack.c.h.b16 %v1093
    %v1419 = vunpack.c.l.b16 %v1094
    %v1420 = vunpack.c.l.b16 %v1095
    %v1421 = vunpack.c.h.b16 %v1095
    %v1422 = vunpack.c.l.b16 %v1096
    %v1423 = vunpack.c.l.b16 %v1097
    %v1424 = vunpack.c.h.b16 %v1097
    %v1425 = vunpack.c.l.b16 %v1098
    %v1426 = vunpack.c.l.b16 %v1099
    %v1427 = vunpack.c.h.b16 %v1099
    %v1428 = vunpack.c.l.b16 %v1100
    %v1429 = vunpack.c.l.b16 %v1101
    %v1430 = vunpack.c.h.b16 %v1101
    %v1431 = vunpack.c.l.b16 %v1102
    %v1432 = vunpack.c.l.b16 %v1103
    %v1433 = vunpack.c.h.b16 %v1103
    %v1434 = vunpack.c.l.b16 %v1104
    %v1435 = vunpack.c.l.b16 %v1105
    %v1436 = vunpack.c.h.b16 %v1105
    %v1437 = vunpack.c.l.b16 %v1106
    %v1438 = vunpack.c.l.b16 %v1107
    %v1439 = vunpack.c.h.b16 %v1107
    %v1440 = vunpack.c.l.b16 %v1108
    %v1441 = vunpack.c.l.b16 %v1109
    %v1442 = vunpack.c.h.b16 %v1109
    %v1443 = vunpack.c.l.b16 %v1110
    %v1444 = vunpack.c.l.b16 %v1111
    %v1445 = vunpack.c.h.b16 %v1111
    %v1446 = vunpack.c.l.b16 %v1112
    %v1447 = vunpack.c.l.b16 %v1113
    %v1448 = vunpack.c.h.b16 %v1113
    %v1449 = vunpack.c.l.b16 %v1114
    %v1450 = vunpack.c.l.b16 %v1115
    %v1451 = vunpack.c.h.b16 %v1115
    %v1452 = vunpack.c.l.b16 %v1116
    %v1453 = vunpack.c.l.b16 %v1117
    %v1454 = vunpack.c.h.b16 %v1117
    %v1455 = vunpack.c.l.b16 %v1118
    %v1456 = vpack.c.b16 %v1267, %v1264
    %v1457 = vpack.c.b16 %v1268, %v1265
    %v1458 = vpack.c.b16 %v1269, %v1266
    %v1459 = vpack.c.b16 %v1273, %v1270
    %v1460 = vpack.c.b16 %v1274, %v1271
    %v1461 = vpack.c.b16 %v1275, %v1272
    %v1462 = vpack.c.b16 %v1279, %v1276
    %v1463 = vpack.c.b16 %v1280, %v1277
    %v1464 = vpack.c.b16 %v1281, %v1278
    %v1465 = vpack.c.b16 %v1285, %v1282
    %v1466 = vpack.c.b16 %v1286, %v1283
    %v1467 = vpack.c.b16 %v1287, %v1284
    %v1468 = vpack.c.b16 %v1291, %v1288
    %v1469 = vpack.c.b16 %v1292, %v1289
    %v1470 = vpack.c.b16 %v1293, %v1290
    %v1471 = vpack.c.b16 %v1297, %v1294
    %v1472 = vpack.c.b16 %v1298, %v1295
    %v1473 = vpack.c.b16 %v1299, %v1296
    %v1474 = vpack.c.b16 %v1303, %v1300
    %v1475 = vpack.c.b16 %v1304, %v1301
    %v1476 = vpack.c.b16 %v1305, %v1302
    %v1477 = vpack.c.b16 %v1309, %v1306
    %v1478 = vpack.c.b16 %v1310, %v1307
    %v1479 = vpack.c.b16 %v1311, %v1308
    %v1480 = vpack.c.b16 %v1315, %v1312
    %v1481 = vpack.c.b16 %v1316, %v1313
    %v1482 = vpack.c.b16 %v1317, %v1314
    %v1483 = vpack.c.b16 %v1321, %v1318
    %v1484 = vpack.c.b16 %v1322, %v1319
    %v1485 = vpack.c.b16 %v1323, %v1320
    %v1486 = vpack.c.b16 %v1327, %v1324
    %v1487 = vpack.c.b16 %v1328, %v1325
    %v1488 = vpack.c.b16 %v1329, %v1326
    %v1489 = vpack.c.b16 %v1333, %v1330
    %v1490 = vpack.c.b16 %v1334, %v1331
    %v1491 = vpack.c.b16 %v1335, %v1332
    %v1492 = vpack.c.b16 %v1339, %v1336
    %v1493 = vpack.c.b16 %v1340, %v1337
    %v1494 = vpack.c.b16 %v1341, %v1338
    %v1495 = vpack.c.b16 %v1345, %v1342
    %v1496 = vpack.c.b16 %v1346, %v1343
    %v1497 = vpack.c.b16 %v1347, %v1344
    %v1498 = vpack.c.b16 %v1351, %v1348
    %v1499 = vpack.c.b16 %v1352, %v1349
    %v1500 = vpack.c.b16 %v1353, %v1350
    %v1501 = vpack.c.b16 %v1357, %v1354
    %v1502 = vpack.c.b16 %v1358, %v1355
    %v1503 = vpack.c.b16 %v1359, %v1356
    %v1504 = vpack.c.b16 %v1363, %v1360
    %v1505 = vpack.c.b16 %v1364, %v1361
    %v1506 = vpack.c.b16 %v1365, %v1362
    %v1507 = vpack.c.b16 %v1369, %v1366
    %v1508 = vpack.c.b16 %v1370, %v1367
    %v1509 = vpack.c.b16 %v1371, %v1368
    %v1510 = vpack.c.b16 %v1375, %v1372
    %v1511 = vpack.c.b16 %v1376, %v1373
    %v1512 = vpack.c.b16 %v1377, %v1374
    %v1513 = vpack.c.b16 %v1381, %v1378
    %v1514 = vpack.c.b16 %v1382, %v1379
    %v1515 = vpack.c.b16 %v1383, %v1380
    %v1516 = vpack.c.b16 %v1387, %v1384
    %v1517 = vpack.c.b16 %v1388, %v1385
    %v1518 = vpack.c.b16 %v1389, %v1386
    %v1519 = vpack.c.b16 %v1393, %v1390
    %v1520 = vpack.c.b16 %v1394, %v1391
    %v1521 = vpack.c.b16 %v1395, %v1392
    %v1522 = vpack.c.b16 %v1399, %v1396
    %v1523 = vpack.c.b16 %v1400, %v1397
    %v1524 = vpack.c.b16 %v1401, %v1398
    %v1525 = vpack.c.b16 %v1405, %v1402
    %v1526 = vpack.c.b16 %v1406, %v1403
    %v1527 = vpack.c.b16 %v1407, %v1404
    %v1528 = vpack.c.b16 %v1411, %v1408
    %v1529 = vpack.c.b16 %v1412, %v1409
    %v1530 = vpack.c.b16 %v1413, %v1410
    %v1531 = vpack.c.b16 %v1417, %v1414
    %v1532 = vpack.c.b16 %v1418, %v1415
    %v1533 = vpack.c.b16 %v1419, %v1416
    %v1534 = vpack.c.b16 %v1423, %v1420
    %v1535 = vpack.c.b16 %v1424, %v1421
    %v1536 = vpack.c.b16 %v1425, %v1422
    %v1537 = vpack.c.b16 %v1429, %v1426
    %v1538 = vpack.c.b16 %v1430, %v1427
    %v1539 = vpack.c.b16 %v1431, %v1428
    %v1540 = vpack.c.b16 %v1435, %v1432
    %v1541 = vpack.c.b16 %v1436, %v1433
    %v1542 = vpack.c.b16 %v1437, %v1434
    %v1543 = vpack.c.b16 %v1441, %v1438
    %v1544 = vpack.c.b16 %v1442, %v1439
    %v1545 = vpack.c.b16 %v1443, %v1440
    %v1546 = vpack.c.b16 %v1447, %v1444
    %v1547 = vpack.c.b16 %v1448, %v1445
    %v1548 = vpack.c.b16 %v1449, %v1446
    %v1549 = vpack.c.b16 %v1453, %v1450
    %v1550 = vpack.c.b16 %v1454, %v1451
    %v1551 = vpack.c.b16 %v1455, %v1452
    %1648 = vmatprep.subr.bf16.mxu0 %v1457
    %1649 = vmatpush1.bf16.msra.mxu0 %v1456
    %1650 = vmatprep.subr.bf16.mxu0 %v1460
    %1651 = vmatpush1.bf16.msra.mxu0 %v1459
    %1652 = vmatprep.subr.bf16.mxu0 %v1463
    %1653 = vmatpush1.bf16.msra.mxu0 %v1462
    %1654 = vmatprep.subr.bf16.mxu0 %v1466
    %1655 = vmatpush1.bf16.msra.mxu0 %v1465
    %1656 = vmatprep.subr.bf16.mxu0 %v1469
    %1657 = vmatpush1.bf16.msra.mxu0 %v1468
    %1658 = vmatprep.subr.bf16.mxu0 %v1472
    %1659 = vmatpush1.bf16.msra.mxu0 %v1471
    %1660 = vmatprep.subr.bf16.mxu0 %v1475
    %1661 = vmatpush1.bf16.msra.mxu0 %v1474
    %1662 = vmatprep.subr.bf16.mxu0 %v1478
    %1663 = vmatpush1.bf16.msra.mxu0 %v1477
    %1664 = vmatprep.subr.bf16.mxu0 %v1481
    %1665 = vmatpush1.bf16.msra.mxu0 %v1480
    %1666 = vmatprep.subr.bf16.mxu0 %v1484
    %1667 = vmatpush1.bf16.msra.mxu0 %v1483
    %1668 = vmatprep.subr.bf16.mxu0 %v1487
    %1669 = vmatpush1.bf16.msra.mxu0 %v1486
    %1670 = vmatprep.subr.bf16.mxu0 %v1490
    %1671 = vmatpush1.bf16.msra.mxu0 %v1489
    %1672 = vmatprep.subr.bf16.mxu0 %v1493
    %1673 = vmatpush1.bf16.msra.mxu0 %v1492
    %1674 = vmatprep.subr.bf16.mxu0 %v1496
    %1675 = vmatpush1.bf16.msra.mxu0 %v1495
    %1676 = vmatprep.subr.bf16.mxu0 %v1499
    %1677 = vmatpush1.bf16.msra.mxu0 %v1498
    %1678 = vmatprep.subr.bf16.mxu0 %v1502
    %1679 = vmatpush1.bf16.msra.mxu0 %v1501
    %1680 = vmatprep.mubr.bf16.mxu0 %v916
    %1681 = vmatmul.mubr.bf16.gmra.mrb[0].mxu0 %v915
    %v1682 = vpop.f32.mrb[0].mxu0
    %v1683 = vadd.f32 %v1124, %v1682
    %v1684 = vpop.f32.mrb[0].mxu0
    %v1685 = vadd.f32 %v1128, %v1684
    %v1686 = vpop.f32.mrb[0].mxu0
    %v1687 = vadd.f32 %v1124, %v1686
    %v1688 = vpop.f32.mrb[0].mxu0
    %v1689 = vadd.f32 %v1128, %v1688
    %1690 = vmatprep.mubr.bf16.mxu0 %v920
    %1691 = vmatmul.mubr.bf16.gmra.mrb[0].mxu0 %v919
    %v1692 = vpop.f32.mrb[0].mxu0
    %v1693 = vadd.f32 %v1124, %v1692
    %v1694 = vpop.f32.mrb[0].mxu0
    %v1695 = vadd.f32 %v1128, %v1694
    %v1696 = vpop.f32.mrb[0].mxu0
    %v1697 = vadd.f32 %v1124, %v1696
    %v1698 = vpop.f32.mrb[0].mxu0
    %v1699 = vadd.f32 %v1128, %v1698
    %1700 = vmatprep.mubr.bf16.mxu0 %v924
    %1701 = vmatmul.mubr.bf16.gmra.mrb[0].mxu0 %v923
    %v1702 = vpop.f32.mrb[0].mxu0
    %v1703 = vadd.f32 %v1124, %v1702
    %v1704 = vpop.f32.mrb[0].mxu0
    %v1705 = vadd.f32 %v1128, %v1704
    %v1706 = vpop.f32.mrb[0].mxu0
    %v1707 = vadd.f32 %v1124, %v1706
    %v1708 = vpop.f32.mrb[0].mxu0
    %v1709 = vadd.f32 %v1128, %v1708
    %1710 = vmatprep.mubr.bf16.mxu0 %v928
    %1711 = vmatmul.mubr.bf16.gmra.mrb[0].mxu0 %v927
    %v1712 = vpop.f32.mrb[0].mxu0
    %v1713 = vadd.f32 %v1124, %v1712
    %v1714 = vpop.f32.mrb[0].mxu0
    %v1715 = vadd.f32 %v1128, %v1714
    %v1716 = vpop.f32.mrb[0].mxu0
    %v1717 = vadd.f32 %v1124, %v1716
    %v1718 = vpop.f32.mrb[0].mxu0
    %v1719 = vadd.f32 %v1128, %v1718
    %1720 = vmatprep.mubr.bf16.mxu0 %v932
    %1721 = vmatmul.mubr.bf16.gmra.mrb[0].mxu0 %v931
    %v1722 = vpop.f32.mrb[0].mxu0
    %v1723 = vadd.f32 %v1124, %v1722
    %v1724 = vpop.f32.mrb[0].mxu0
    %v1725 = vadd.f32 %v1128, %v1724
    %v1726 = vpop.f32.mrb[0].mxu0
    %v1727 = vadd.f32 %v1124, %v1726
    %v1728 = vpop.f32.mrb[0].mxu0
    %v1729 = vadd.f32 %v1128, %v1728
    %1730 = vmatprep.mubr.bf16.mxu0 %v936
    %1731 = vmatmul.mubr.bf16.gmra.mrb[0].mxu0 %v935
    %v1732 = vpop.f32.mrb[0].mxu0
    %v1733 = vadd.f32 %v1124, %v1732
    %v1734 = vpop.f32.mrb[0].mxu0
    %v1735 = vadd.f32 %v1128, %v1734
    %v1736 = vpop.f32.mrb[0].mxu0
    %v1737 = vadd.f32 %v1124, %v1736
    %v1738 = vpop.f32.mrb[0].mxu0
    %v1739 = vadd.f32 %v1128, %v1738
    %1740 = vmatprep.mubr.bf16.mxu0 %v940
    %1741 = vmatmul.mubr.bf16.gmra.mrb[0].mxu0 %v939
    %v1742 = vpop.f32.mrb[0].mxu0
    %v1743 = vadd.f32 %v1124, %v1742
    %v1744 = vpop.f32.mrb[0].mxu0
    %v1745 = vadd.f32 %v1128, %v1744
    %v1746 = vpop.f32.mrb[0].mxu0
    %v1747 = vadd.f32 %v1124, %v1746
    %v1748 = vpop.f32.mrb[0].mxu0
    %v1749 = vadd.f32 %v1128, %v1748
    %1750 = vmatprep.mubr.bf16.mxu0 %v944
    %1751 = vmatmul.mubr.bf16.gmra.mrb[0].mxu0 %v943
    %v1752 = vpop.f32.mrb[0].mxu0
    %v1753 = vadd.f32 %v1124, %v1752
    %v1754 = vpop.f32.mrb[0].mxu0
    %v1755 = vadd.f32 %v1128, %v1754
    %v1756 = vpop.f32.mrb[0].mxu0
    %v1757 = vadd.f32 %v1124, %v1756
    %v1758 = vpop.f32.mrb[0].mxu0
    %v1759 = vadd.f32 %v1128, %v1758
    %1760 = vmatprep.mubr.bf16.mxu0 %v948
    %1761 = vmatmul.mubr.bf16.gmra.mrb[0].mxu0 %v947
    %v1762 = vpop.f32.mrb[0].mxu0
    %v1763 = vadd.f32 %v1124, %v1762
    %v1764 = vpop.f32.mrb[0].mxu0
    %v1765 = vadd.f32 %v1128, %v1764
    %v1766 = vpop.f32.mrb[0].mxu0
    %v1767 = vadd.f32 %v1124, %v1766
    %v1768 = vpop.f32.mrb[0].mxu0
    %v1769 = vadd.f32 %v1128, %v1768
    %1770 = vmatprep.mubr.bf16.mxu0 %v952
    %1771 = vmatmul.mubr.bf16.gmra.mrb[0].mxu0 %v951
    %v1772 = vpop.f32.mrb[0].mxu0
    %v1773 = vadd.f32 %v1124, %v1772
    %v1774 = vpop.f32.mrb[0].mxu0
    %v1775 = vadd.f32 %v1128, %v1774
    %v1776 = vpop.f32.mrb[0].mxu0
    %v1777 = vadd.f32 %v1124, %v1776
    %v1778 = vpop.f32.mrb[0].mxu0
    %v1779 = vadd.f32 %v1128, %v1778
    %1780 = vmatprep.mubr.bf16.mxu0 %v956
    %1781 = vmatmul.mubr.bf16.gmra.mrb[0].mxu0 %v955
    %v1782 = vpop.f32.mrb[0].mxu0
    %v1783 = vadd.f32 %v1124, %v1782
    %v1784 = vpop.f32.mrb[0].mxu0
    %v1785 = vadd.f32 %v1128, %v1784
    %v1786 = vpop.f32.mrb[0].mxu0
    %v1787 = vadd.f32 %v1124, %v1786
    %v1788 = vpop.f32.mrb[0].mxu0
    %v1789 = vadd.f32 %v1128, %v1788
    %1790 = vmatprep.mubr.bf16.mxu0 %v960
    %1791 = vmatmul.mubr.bf16.gmra.mrb[0].mxu0 %v959
    %v1792 = vpop.f32.mrb[0].mxu0
    %v1793 = vadd.f32 %v1124, %v1792
    %v1794 = vpop.f32.mrb[0].mxu0
    %v1795 = vadd.f32 %v1128, %v1794
    %v1796 = vpop.f32.mrb[0].mxu0
    %v1797 = vadd.f32 %v1124, %v1796
    %v1798 = vpop.f32.mrb[0].mxu0
    %v1799 = vadd.f32 %v1128, %v1798
    %1800 = vmatprep.mubr.bf16.mxu0 %v964
    %1801 = vmatmul.mubr.bf16.gmra.mrb[0].mxu0 %v963
    %v1802 = vpop.f32.mrb[0].mxu0
    %v1803 = vadd.f32 %v1124, %v1802
    %v1804 = vpop.f32.mrb[0].mxu0
    %v1805 = vadd.f32 %v1128, %v1804
    %v1806 = vpop.f32.mrb[0].mxu0
    %v1807 = vadd.f32 %v1124, %v1806
    %v1808 = vpop.f32.mrb[0].mxu0
    %v1809 = vadd.f32 %v1128, %v1808
    %1810 = vmatprep.mubr.bf16.mxu0 %v968
    %1811 = vmatmul.mubr.bf16.gmra.mrb[0].mxu0 %v967
    %v1812 = vpop.f32.mrb[0].mxu0
    %v1813 = vadd.f32 %v1124, %v1812
    %v1814 = vpop.f32.mrb[0].mxu0
    %v1815 = vadd.f32 %v1128, %v1814
    %v1816 = vpop.f32.mrb[0].mxu0
    %v1817 = vadd.f32 %v1124, %v1816
    %v1818 = vpop.f32.mrb[0].mxu0
    %v1819 = vadd.f32 %v1128, %v1818
    %1820 = vmatprep.mubr.bf16.mxu0 %v972
    %1821 = vmatmul.mubr.bf16.gmra.mrb[0].mxu0 %v971
    %v1822 = vpop.f32.mrb[0].mxu0
    %v1823 = vadd.f32 %v1124, %v1822
    %v1824 = vpop.f32.mrb[0].mxu0
    %v1825 = vadd.f32 %v1128, %v1824
    %v1826 = vpop.f32.mrb[0].mxu0
    %v1827 = vadd.f32 %v1124, %v1826
    %v1828 = vpop.f32.mrb[0].mxu0
    %v1829 = vadd.f32 %v1128, %v1828
    %1830 = vmatprep.mubr.bf16.mxu0 %v976
    %1831 = vmatmul.mubr.bf16.gmra.mrb[0].mxu0 %v975
    %v1832 = vpop.f32.mrb[0].mxu0
    %v1833 = vadd.f32 %v1124, %v1832
    %v1834 = vpop.f32.mrb[0].mxu0
    %v1835 = vadd.f32 %v1128, %v1834
    %v1836 = vpop.f32.mrb[0].mxu0
    %v1837 = vadd.f32 %v1124, %v1836
    %v1838 = vpop.f32.mrb[0].mxu0
    %v1839 = vadd.f32 %v1128, %v1838
    %1840 = vmatprep.mubr.bf16.mxu0 %v980
    %1841 = vmatmul.mubr.bf16.gmra.mrb[0].mxu0 %v979
    %v1842 = vpop.f32.mrb[0].mxu0
    %v1843 = vadd.f32 %v1124, %v1842
    %v1844 = vpop.f32.mrb[0].mxu0
    %v1845 = vadd.f32 %v1128, %v1844
    %v1846 = vpop.f32.mrb[0].mxu0
    %v1847 = vadd.f32 %v1124, %v1846
    %v1848 = vpop.f32.mrb[0].mxu0
    %v1849 = vadd.f32 %v1128, %v1848
    %1850 = vmatprep.mubr.bf16.mxu0 %v984
    %1851 = vmatmul.mubr.bf16.gmra.mrb[0].mxu0 %v983
    %v1852 = vpop.f32.mrb[0].mxu0
    %v1853 = vadd.f32 %v1124, %v1852
    %v1854 = vpop.f32.mrb[0].mxu0
    %v1855 = vadd.f32 %v1128, %v1854
    %v1856 = vpop.f32.mrb[0].mxu0
    %v1857 = vadd.f32 %v1124, %v1856
    %v1858 = vpop.f32.mrb[0].mxu0
    %v1859 = vadd.f32 %v1128, %v1858
    %1860 = vmatprep.mubr.bf16.mxu0 %v988
    %1861 = vmatmul.mubr.bf16.gmra.mrb[0].mxu0 %v987
    %v1862 = vpop.f32.mrb[0].mxu0
    %v1863 = vadd.f32 %v1124, %v1862
    %v1864 = vpop.f32.mrb[0].mxu0
    %v1865 = vadd.f32 %v1128, %v1864
    %v1866 = vpop.f32.mrb[0].mxu0
    %v1867 = vadd.f32 %v1124, %v1866
    %v1868 = vpop.f32.mrb[0].mxu0
    %v1869 = vadd.f32 %v1128, %v1868
    %1870 = vdwg.mxu0
    %1871 = vmatprep.subr.bf16.mxu0 %v1505
    %1872 = vmatpush1.bf16.msra.mxu0 %v1504
    %1873 = vmatprep.subr.bf16.mxu0 %v1508
    %1874 = vmatpush1.bf16.msra.mxu0 %v1507
    %1875 = vmatprep.subr.bf16.mxu0 %v1511
    %1876 = vmatpush1.bf16.msra.mxu0 %v1510
    %1877 = vmatprep.subr.bf16.mxu0 %v1514
    %1878 = vmatpush1.bf16.msra.mxu0 %v1513
    %1879 = vmatprep.subr.bf16.mxu0 %v1517
    %1880 = vmatpush1.bf16.msra.mxu0 %v1516
    %1881 = vmatprep.subr.bf16.mxu0 %v1520
    %1882 = vmatpush1.bf16.msra.mxu0 %v1519
    %1883 = vmatprep.subr.bf16.mxu0 %v1523
    %1884 = vmatpush1.bf16.msra.mxu0 %v1522
    %1885 = vmatprep.subr.bf16.mxu0 %v1526
    %1886 = vmatpush1.bf16.msra.mxu0 %v1525
    %1887 = vmatprep.subr.bf16.mxu0 %v1529
    %1888 = vmatpush1.bf16.msra.mxu0 %v1528
    %1889 = vmatprep.subr.bf16.mxu0 %v1532
    %1890 = vmatpush1.bf16.msra.mxu0 %v1531
    %1891 = vmatprep.subr.bf16.mxu0 %v1535
    %1892 = vmatpush1.bf16.msra.mxu0 %v1534
    %1893 = vmatprep.subr.bf16.mxu0 %v1538
    %1894 = vmatpush1.bf16.msra.mxu0 %v1537
    %1895 = vmatprep.subr.bf16.mxu0 %v1541
    %1896 = vmatpush1.bf16.msra.mxu0 %v1540
    %1897 = vmatprep.subr.bf16.mxu0 %v1544
    %1898 = vmatpush1.bf16.msra.mxu0 %v1543
    %1899 = vmatprep.subr.bf16.mxu0 %v1547
    %1900 = vmatpush1.bf16.msra.mxu0 %v1546
    %1901 = vmatprep.subr.bf16.mxu0 %v1550
    %1902 = vmatpush1.bf16.msra.mxu0 %v1549
    %1903 = vmatprep.mubr.bf16.mxu0 %v918
    %1904 = vmatmul.mubr.bf16.gmra.mrb[0].mxu0 %v917
    %v1905 = vpop.f32.mrb[0].mxu0
    %v1906 = vadd.f32 %v1683, %v1905
    %v1907 = vpop.f32.mrb[0].mxu0
    %v1908 = vadd.f32 %v1685, %v1907
    %v1909 = vpop.f32.mrb[0].mxu0
    %v1910 = vadd.f32 %v1687, %v1909
    %v1911 = vpop.f32.mrb[0].mxu0
    %v1912 = vadd.f32 %v1689, %v1911
    %1913 = vmatprep.mubr.bf16.mxu0 %v922
    %1914 = vmatmul.mubr.bf16.gmra.mrb[0].mxu0 %v921
    %v1915 = vpop.f32.mrb[0].mxu0
    %v1916 = vadd.f32 %v1693, %v1915
    %v1917 = vpop.f32.mrb[0].mxu0
    %v1918 = vadd.f32 %v1695, %v1917
    %v1919 = vpop.f32.mrb[0].mxu0
    %v1920 = vadd.f32 %v1697, %v1919
    %v1921 = vpop.f32.mrb[0].mxu0
    %v1922 = vadd.f32 %v1699, %v1921
    %1923 = vmatprep.mubr.bf16.mxu0 %v926
    %1924 = vmatmul.mubr.bf16.gmra.mrb[0].mxu0 %v925
    %v1925 = vpop.f32.mrb[0].mxu0
    %v1926 = vadd.f32 %v1703, %v1925
    %v1927 = vpop.f32.mrb[0].mxu0
    %v1928 = vadd.f32 %v1705, %v1927
    %v1929 = vpop.f32.mrb[0].mxu0
    %v1930 = vadd.f32 %v1707, %v1929
    %v1931 = vpop.f32.mrb[0].mxu0
    %v1932 = vadd.f32 %v1709, %v1931
    %1933 = vmatprep.mubr.bf16.mxu0 %v930
    %1934 = vmatmul.mubr.bf16.gmra.mrb[0].mxu0 %v929
    %v1935 = vpop.f32.mrb[0].mxu0
    %v1936 = vadd.f32 %v1713, %v1935
    %v1937 = vpop.f32.mrb[0].mxu0
    %v1938 = vadd.f32 %v1715, %v1937
    %v1939 = vpop.f32.mrb[0].mxu0
    %v1940 = vadd.f32 %v1717, %v1939
    %v1941 = vpop.f32.mrb[0].mxu0
    %v1942 = vadd.f32 %v1719, %v1941
    %1943 = vmatprep.mubr.bf16.mxu0 %v934
    %1944 = vmatmul.mubr.bf16.gmra.mrb[0].mxu0 %v933
    %v1945 = vpop.f32.mrb[0].mxu0
    %v1946 = vadd.f32 %v1723, %v1945
    %v1947 = vpop.f32.mrb[0].mxu0
    %v1948 = vadd.f32 %v1725, %v1947
    %v1949 = vpop.f32.mrb[0].mxu0
    %v1950 = vadd.f32 %v1727, %v1949
    %v1951 = vpop.f32.mrb[0].mxu0
    %v1952 = vadd.f32 %v1729, %v1951
    %1953 = vmatprep.mubr.bf16.mxu0 %v938
    %1954 = vmatmul.mubr.bf16.gmra.mrb[0].mxu0 %v937
    %v1955 = vpop.f32.mrb[0].mxu0
    %v1956 = vadd.f32 %v1733, %v1955
    %v1957 = vpop.f32.mrb[0].mxu0
    %v1958 = vadd.f32 %v1735, %v1957
    %v1959 = vpop.f32.mrb[0].mxu0
    %v1960 = vadd.f32 %v1737, %v1959
    %v1961 = vpop.f32.mrb[0].mxu0
    %v1962 = vadd.f32 %v1739, %v1961
    %1963 = vmatprep.mubr.bf16.mxu0 %v942
    %1964 = vmatmul.mubr.bf16.gmra.mrb[0].mxu0 %v941
    %v1965 = vpop.f32.mrb[0].mxu0
    %v1966 = vadd.f32 %v1743, %v1965
    %v1967 = vpop.f32.mrb[0].mxu0
    %v1968 = vadd.f32 %v1745, %v1967
    %v1969 = vpop.f32.mrb[0].mxu0
    %v1970 = vadd.f32 %v1747, %v1969
    %v1971 = vpop.f32.mrb[0].mxu0
    %v1972 = vadd.f32 %v1749, %v1971
    %1973 = vmatprep.mubr.bf16.mxu0 %v946
    %1974 = vmatmul.mubr.bf16.gmra.mrb[0].mxu0 %v945
    %v1975 = vpop.f32.mrb[0].mxu0
    %v1976 = vadd.f32 %v1753, %v1975
    %v1977 = vpop.f32.mrb[0].mxu0
    %v1978 = vadd.f32 %v1755, %v1977
    %v1979 = vpop.f32.mrb[0].mxu0
    %v1980 = vadd.f32 %v1757, %v1979
    %v1981 = vpop.f32.mrb[0].mxu0
    %v1982 = vadd.f32 %v1759, %v1981
    %1983 = vmatprep.mubr.bf16.mxu0 %v950
    %1984 = vmatmul.mubr.bf16.gmra.mrb[0].mxu0 %v949
    %v1985 = vpop.f32.mrb[0].mxu0
    %v1986 = vadd.f32 %v1763, %v1985
    %v1987 = vpop.f32.mrb[0].mxu0
    %v1988 = vadd.f32 %v1765, %v1987
    %v1989 = vpop.f32.mrb[0].mxu0
    %v1990 = vadd.f32 %v1767, %v1989
    %v1991 = vpop.f32.mrb[0].mxu0
    %v1992 = vadd.f32 %v1769, %v1991
    %1993 = vmatprep.mubr.bf16.mxu0 %v954
    %1994 = vmatmul.mubr.bf16.gmra.mrb[0].mxu0 %v953
    %v1995 = vpop.f32.mrb[0].mxu0
    %v1996 = vadd.f32 %v1773, %v1995
    %v1997 = vpop.f32.mrb[0].mxu0
    %v1998 = vadd.f32 %v1775, %v1997
    %v1999 = vpop.f32.mrb[0].mxu0
    %v2000 = vadd.f32 %v1777, %v1999
    %v2001 = vpop.f32.mrb[0].mxu0
    %v2002 = vadd.f32 %v1779, %v2001
    %2003 = vmatprep.mubr.bf16.mxu0 %v958
    %2004 = vmatmul.mubr.bf16.gmra.mrb[0].mxu0 %v957
    %v2005 = vpop.f32.mrb[0].mxu0
    %v2006 = vadd.f32 %v1783, %v2005
    %v2007 = vpop.f32.mrb[0].mxu0
    %v2008 = vadd.f32 %v1785, %v2007
    %v2009 = vpop.f32.mrb[0].mxu0
    %v2010 = vadd.f32 %v1787, %v2009
    %v2011 = vpop.f32.mrb[0].mxu0
    %v2012 = vadd.f32 %v1789, %v2011
    %2013 = vmatprep.mubr.bf16.mxu0 %v962
    %2014 = vmatmul.mubr.bf16.gmra.mrb[0].mxu0 %v961
    %v2015 = vpop.f32.mrb[0].mxu0
    %v2016 = vadd.f32 %v1793, %v2015
    %v2017 = vpop.f32.mrb[0].mxu0
    %v2018 = vadd.f32 %v1795, %v2017
    %v2019 = vpop.f32.mrb[0].mxu0
    %v2020 = vadd.f32 %v1797, %v2019
    %v2021 = vpop.f32.mrb[0].mxu0
    %v2022 = vadd.f32 %v1799, %v2021
    %2023 = vmatprep.mubr.bf16.mxu0 %v966
    %2024 = vmatmul.mubr.bf16.gmra.mrb[0].mxu0 %v965
    %v2025 = vpop.f32.mrb[0].mxu0
    %v2026 = vadd.f32 %v1803, %v2025
    %v2027 = vpop.f32.mrb[0].mxu0
    %v2028 = vadd.f32 %v1805, %v2027
    %v2029 = vpop.f32.mrb[0].mxu0
    %v2030 = vadd.f32 %v1807, %v2029
    %v2031 = vpop.f32.mrb[0].mxu0
    %v2032 = vadd.f32 %v1809, %v2031
    %2033 = vmatprep.mubr.bf16.mxu0 %v970
    %2034 = vmatmul.mubr.bf16.gmra.mrb[0].mxu0 %v969
    %v2035 = vpop.f32.mrb[0].mxu0
    %v2036 = vadd.f32 %v1813, %v2035
    %v2037 = vpop.f32.mrb[0].mxu0
    %v2038 = vadd.f32 %v1815, %v2037
    %v2039 = vpop.f32.mrb[0].mxu0
    %v2040 = vadd.f32 %v1817, %v2039
    %v2041 = vpop.f32.mrb[0].mxu0
    %v2042 = vadd.f32 %v1819, %v2041
    %2043 = vmatprep.mubr.bf16.mxu0 %v974
    %2044 = vmatmul.mubr.bf16.gmra.mrb[0].mxu0 %v973
    %v2045 = vpop.f32.mrb[0].mxu0
    %v2046 = vadd.f32 %v1823, %v2045
    %v2047 = vpop.f32.mrb[0].mxu0
    %v2048 = vadd.f32 %v1825, %v2047
    %v2049 = vpop.f32.mrb[0].mxu0
    %v2050 = vadd.f32 %v1827, %v2049
    %v2051 = vpop.f32.mrb[0].mxu0
    %v2052 = vadd.f32 %v1829, %v2051
    %2053 = vmatprep.mubr.bf16.mxu0 %v978
    %2054 = vmatmul.mubr.bf16.gmra.mrb[0].mxu0 %v977
    %v2055 = vpop.f32.mrb[0].mxu0
    %v2056 = vadd.f32 %v1833, %v2055
    %v2057 = vpop.f32.mrb[0].mxu0
    %v2058 = vadd.f32 %v1835, %v2057
    %v2059 = vpop.f32.mrb[0].mxu0
    %v2060 = vadd.f32 %v1837, %v2059
    %v2061 = vpop.f32.mrb[0].mxu0
    %v2062 = vadd.f32 %v1839, %v2061
    %2063 = vmatprep.mubr.bf16.mxu0 %v982
    %2064 = vmatmul.mubr.bf16.gmra.mrb[0].mxu0 %v981
    %v2065 = vpop.f32.mrb[0].mxu0
    %v2066 = vadd.f32 %v1843, %v2065
    %v2067 = vpop.f32.mrb[0].mxu0
    %v2068 = vadd.f32 %v1845, %v2067
    %v2069 = vpop.f32.mrb[0].mxu0
    %v2070 = vadd.f32 %v1847, %v2069
    %v2071 = vpop.f32.mrb[0].mxu0
    %v2072 = vadd.f32 %v1849, %v2071
    %2073 = vmatprep.mubr.bf16.mxu0 %v986
    %2074 = vmatmul.mubr.bf16.gmra.mrb[0].mxu0 %v985
    %v2075 = vpop.f32.mrb[0].mxu0
    %v2076 = vadd.f32 %v1853, %v2075
    %v2077 = vpop.f32.mrb[0].mxu0
    %v2078 = vadd.f32 %v1855, %v2077
    %v2079 = vpop.f32.mrb[0].mxu0
    %v2080 = vadd.f32 %v1857, %v2079
    %v2081 = vpop.f32.mrb[0].mxu0
    %v2082 = vadd.f32 %v1859, %v2081
    %2083 = vmatprep.mubr.bf16.mxu0 %v990
    %2084 = vmatmul.mubr.bf16.gmra.mrb[0].mxu0 %v989
    %v2085 = vpop.f32.mrb[0].mxu0
    %v2086 = vadd.f32 %v1863, %v2085
    %v2087 = vpop.f32.mrb[0].mxu0
    %v2088 = vadd.f32 %v1865, %v2087
    %v2089 = vpop.f32.mrb[0].mxu0
    %v2090 = vadd.f32 %v1867, %v2089
    %v2091 = vpop.f32.mrb[0].mxu0
    %v2092 = vadd.f32 %v1869, %v2091
    %2093 = vdwg.mxu0
    %2094 = vmatprep.subr.bf16.mxu0 0
    %2095 = vmatpush1.bf16.msra.mxu0 %v1458
    %2096 = vmatprep.subr.bf16.mxu0 0
    %2097 = vmatpush1.bf16.msra.mxu0 %v1461
    %2098 = vmatprep.subr.bf16.mxu0 0
    %2099 = vmatpush1.bf16.msra.mxu0 %v1464
    %2100 = vmatprep.subr.bf16.mxu0 0
    %2101 = vmatpush1.bf16.msra.mxu0 %v1467
    %2102 = vmatprep.subr.bf16.mxu0 0
    %2103 = vmatpush1.bf16.msra.mxu0 %v1470
    %2104 = vmatprep.subr.bf16.mxu0 0
    %2105 = vmatpush1.bf16.msra.mxu0 %v1473
    %2106 = vmatprep.subr.bf16.mxu0 0
    %2107 = vmatpush1.bf16.msra.mxu0 %v1476
    %2108 = vmatprep.subr.bf16.mxu0 0
    %2109 = vmatpush1.bf16.msra.mxu0 %v1479
    %2110 = vmatprep.subr.bf16.mxu0 0
    %2111 = vmatpush1.bf16.msra.mxu0 %v1482
    %2112 = vmatprep.subr.bf16.mxu0 0
    %2113 = vmatpush1.bf16.msra.mxu0 %v1485
    %2114 = vmatprep.subr.bf16.mxu0 0
    %2115 = vmatpush1.bf16.msra.mxu0 %v1488
    %2116 = vmatprep.subr.bf16.mxu0 0
    %2117 = vmatpush1.bf16.msra.mxu0 %v1491
    %2118 = vmatprep.subr.bf16.mxu0 0
    %2119 = vmatpush1.bf16.msra.mxu0 %v1494
    %2120 = vmatprep.subr.bf16.mxu0 0
    %2121 = vmatpush1.bf16.msra.mxu0 %v1497
    %2122 = vmatprep.subr.bf16.mxu0 0
    %2123 = vmatpush1.bf16.msra.mxu0 %v1500
    %2124 = vmatprep.subr.bf16.mxu0 0
    %2125 = vmatpush1.bf16.msra.mxu0 %v1503
    %2126 = vmatprep.mubr.bf16.mxu0 %v916
    %2127 = vmatmul.mubr.bf16.gmra.mrb[0].mxu0 %v915
    %v2128 = vpop.f32.mrb[0].mxu0
    %v2129 = vadd.f32 %v1132, %v2128
    %v2130 = vpop.f32.mrb[0].mxu0
    %v2131 = vpop.f32.mrb[0].mxu0
    %v2132 = vadd.f32 %v1132, %v2131
    %v2133 = vpop.f32.mrb[0].mxu0
    %2134 = vmatprep.mubr.bf16.mxu0 %v920
    %2135 = vmatmul.mubr.bf16.gmra.mrb[0].mxu0 %v919
    %v2136 = vpop.f32.mrb[0].mxu0
    %v2137 = vadd.f32 %v1132, %v2136
    %v2138 = vpop.f32.mrb[0].mxu0
    %v2139 = vpop.f32.mrb[0].mxu0
    %v2140 = vadd.f32 %v1132, %v2139
    %v2141 = vpop.f32.mrb[0].mxu0
    %2142 = vmatprep.mubr.bf16.mxu0 %v924
    %2143 = vmatmul.mubr.bf16.gmra.mrb[0].mxu0 %v923
    %v2144 = vpop.f32.mrb[0].mxu0
    %v2145 = vadd.f32 %v1132, %v2144
    %v2146 = vpop.f32.mrb[0].mxu0
    %v2147 = vpop.f32.mrb[0].mxu0
    %v2148 = vadd.f32 %v1132, %v2147
    %v2149 = vpop.f32.mrb[0].mxu0
    %2150 = vmatprep.mubr.bf16.mxu0 %v928
    %2151 = vmatmul.mubr.bf16.gmra.mrb[0].mxu0 %v927
    %v2152 = vpop.f32.mrb[0].mxu0
    %v2153 = vadd.f32 %v1132, %v2152
    %v2154 = vpop.f32.mrb[0].mxu0
    %v2155 = vpop.f32.mrb[0].mxu0
    %v2156 = vadd.f32 %v1132, %v2155
    %v2157 = vpop.f32.mrb[0].mxu0
    %2158 = vmatprep.mubr.bf16.mxu0 %v932
    %2159 = vmatmul.mubr.bf16.gmra.mrb[0].mxu0 %v931
    %v2160 = vpop.f32.mrb[0].mxu0
    %v2161 = vadd.f32 %v1132, %v2160
    %v2162 = vpop.f32.mrb[0].mxu0
    %v2163 = vpop.f32.mrb[0].mxu0
    %v2164 = vadd.f32 %v1132, %v2163
    %v2165 = vpop.f32.mrb[0].mxu0
    %2166 = vmatprep.mubr.bf16.mxu0 %v936
    %2167 = vmatmul.mubr.bf16.gmra.mrb[0].mxu0 %v935
    %v2168 = vpop.f32.mrb[0].mxu0
    %v2169 = vadd.f32 %v1132, %v2168
    %v2170 = vpop.f32.mrb[0].mxu0
    %v2171 = vpop.f32.mrb[0].mxu0
    %v2172 = vadd.f32 %v1132, %v2171
    %v2173 = vpop.f32.mrb[0].mxu0
    %2174 = vmatprep.mubr.bf16.mxu0 %v940
    %2175 = vmatmul.mubr.bf16.gmra.mrb[0].mxu0 %v939
    %v2176 = vpop.f32.mrb[0].mxu0
    %v2177 = vadd.f32 %v1132, %v2176
    %v2178 = vpop.f32.mrb[0].mxu0
    %v2179 = vpop.f32.mrb[0].mxu0
    %v2180 = vadd.f32 %v1132, %v2179
    %v2181 = vpop.f32.mrb[0].mxu0
    %2182 = vmatprep.mubr.bf16.mxu0 %v944
    %2183 = vmatmul.mubr.bf16.gmra.mrb[0].mxu0 %v943
    %v2184 = vpop.f32.mrb[0].mxu0
    %v2185 = vadd.f32 %v1132, %v2184
    %v2186 = vpop.f32.mrb[0].mxu0
    %v2187 = vpop.f32.mrb[0].mxu0
    %v2188 = vadd.f32 %v1132, %v2187
    %v2189 = vpop.f32.mrb[0].mxu0
    %2190 = vmatprep.mubr.bf16.mxu0 %v948
    %2191 = vmatmul.mubr.bf16.gmra.mrb[0].mxu0 %v947
    %v2192 = vpop.f32.mrb[0].mxu0
    %v2193 = vadd.f32 %v1132, %v2192
    %v2194 = vpop.f32.mrb[0].mxu0
    %v2195 = vpop.f32.mrb[0].mxu0
    %v2196 = vadd.f32 %v1132, %v2195
    %v2197 = vpop.f32.mrb[0].mxu0
    %2198 = vmatprep.mubr.bf16.mxu0 %v952
    %2199 = vmatmul.mubr.bf16.gmra.mrb[0].mxu0 %v951
    %v2200 = vpop.f32.mrb[0].mxu0
    %v2201 = vadd.f32 %v1132, %v2200
    %v2202 = vpop.f32.mrb[0].mxu0
    %v2203 = vpop.f32.mrb[0].mxu0
    %v2204 = vadd.f32 %v1132, %v2203
    %v2205 = vpop.f32.mrb[0].mxu0
    %2206 = vmatprep.mubr.bf16.mxu0 %v956
    %2207 = vmatmul.mubr.bf16.gmra.mrb[0].mxu0 %v955
    %v2208 = vpop.f32.mrb[0].mxu0
    %v2209 = vadd.f32 %v1132, %v2208
    %v2210 = vpop.f32.mrb[0].mxu0
    %v2211 = vpop.f32.mrb[0].mxu0
    %v2212 = vadd.f32 %v1132, %v2211
    %v2213 = vpop.f32.mrb[0].mxu0
    %2214 = vmatprep.mubr.bf16.mxu0 %v960
    %2215 = vmatmul.mubr.bf16.gmra.mrb[0].mxu0 %v959
    %v2216 = vpop.f32.mrb[0].mxu0
    %v2217 = vadd.f32 %v1132, %v2216
    %v2218 = vpop.f32.mrb[0].mxu0
    %v2219 = vpop.f32.mrb[0].mxu0
    %v2220 = vadd.f32 %v1132, %v2219
    %v2221 = vpop.f32.mrb[0].mxu0
    %2222 = vmatprep.mubr.bf16.mxu0 %v964
    %2223 = vmatmul.mubr.bf16.gmra.mrb[0].mxu0 %v963
    %v2224 = vpop.f32.mrb[0].mxu0
    %v2225 = vadd.f32 %v1132, %v2224
    %v2226 = vpop.f32.mrb[0].mxu0
    %v2227 = vpop.f32.mrb[0].mxu0
    %v2228 = vadd.f32 %v1132, %v2227
    %v2229 = vpop.f32.mrb[0].mxu0
    %2230 = vmatprep.mubr.bf16.mxu0 %v968
    %2231 = vmatmul.mubr.bf16.gmra.mrb[0].mxu0 %v967
    %v2232 = vpop.f32.mrb[0].mxu0
    %v2233 = vadd.f32 %v1132, %v2232
    %v2234 = vpop.f32.mrb[0].mxu0
    %v2235 = vpop.f32.mrb[0].mxu0
    %v2236 = vadd.f32 %v1132, %v2235
    %v2237 = vpop.f32.mrb[0].mxu0
    %2238 = vmatprep.mubr.bf16.mxu0 %v972
    %2239 = vmatmul.mubr.bf16.gmra.mrb[0].mxu0 %v971
    %v2240 = vpop.f32.mrb[0].mxu0
    %v2241 = vadd.f32 %v1132, %v2240
    %v2242 = vpop.f32.mrb[0].mxu0
    %v2243 = vpop.f32.mrb[0].mxu0
    %v2244 = vadd.f32 %v1132, %v2243
    %v2245 = vpop.f32.mrb[0].mxu0
    %2246 = vmatprep.mubr.bf16.mxu0 %v976
    %2247 = vmatmul.mubr.bf16.gmra.mrb[0].mxu0 %v975
    %v2248 = vpop.f32.mrb[0].mxu0
    %v2249 = vadd.f32 %v1132, %v2248
    %v2250 = vpop.f32.mrb[0].mxu0
    %v2251 = vpop.f32.mrb[0].mxu0
    %v2252 = vadd.f32 %v1132, %v2251
    %v2253 = vpop.f32.mrb[0].mxu0
    %2254 = vmatprep.mubr.bf16.mxu0 %v980
    %2255 = vmatmul.mubr.bf16.gmra.mrb[0].mxu0 %v979
    %v2256 = vpop.f32.mrb[0].mxu0
    %v2257 = vadd.f32 %v1132, %v2256
    %v2258 = vpop.f32.mrb[0].mxu0
    %v2259 = vpop.f32.mrb[0].mxu0
    %v2260 = vadd.f32 %v1132, %v2259
    %v2261 = vpop.f32.mrb[0].mxu0
    %2262 = vmatprep.mubr.bf16.mxu0 %v984
    %2263 = vmatmul.mubr.bf16.gmra.mrb[0].mxu0 %v983
    %v2264 = vpop.f32.mrb[0].mxu0
    %v2265 = vadd.f32 %v1132, %v2264
    %v2266 = vpop.f32.mrb[0].mxu0
    %v2267 = vpop.f32.mrb[0].mxu0
    %v2268 = vadd.f32 %v1132, %v2267
    %v2269 = vpop.f32.mrb[0].mxu0
    %2270 = vmatprep.mubr.bf16.mxu0 %v988
    %2271 = vmatmul.mubr.bf16.gmra.mrb[0].mxu0 %v987
    %v2272 = vpop.f32.mrb[0].mxu0
    %v2273 = vadd.f32 %v1132, %v2272
    %v2274 = vpop.f32.mrb[0].mxu0
    %v2275 = vpop.f32.mrb[0].mxu0
    %v2276 = vadd.f32 %v1132, %v2275
    %v2277 = vpop.f32.mrb[0].mxu0
    %2278 = vdwg.mxu0
    %2279 = vmatprep.subr.bf16.mxu0 0
    %2280 = vmatpush1.bf16.msra.mxu0 %v1506
    %2281 = vmatprep.subr.bf16.mxu0 0
    %2282 = vmatpush1.bf16.msra.mxu0 %v1509
    %2283 = vmatprep.subr.bf16.mxu0 0
    %2284 = vmatpush1.bf16.msra.mxu0 %v1512
    %2285 = vmatprep.subr.bf16.mxu0 0
    %2286 = vmatpush1.bf16.msra.mxu0 %v1515
    %2287 = vmatprep.subr.bf16.mxu0 0
    %2288 = vmatpush1.bf16.msra.mxu0 %v1518
    %2289 = vmatprep.subr.bf16.mxu0 0
    %2290 = vmatpush1.bf16.msra.mxu0 %v1521
    %2291 = vmatprep.subr.bf16.mxu0 0
    %2292 = vmatpush1.bf16.msra.mxu0 %v1524
    %2293 = vmatprep.subr.bf16.mxu0 0
    %2294 = vmatpush1.bf16.msra.mxu0 %v1527
    %2295 = vmatprep.subr.bf16.mxu0 0
    %2296 = vmatpush1.bf16.msra.mxu0 %v1530
    %2297 = vmatprep.subr.bf16.mxu0 0
    %2298 = vmatpush1.bf16.msra.mxu0 %v1533
    %2299 = vmatprep.subr.bf16.mxu0 0
    %2300 = vmatpush1.bf16.msra.mxu0 %v1536
    %2301 = vmatprep.subr.bf16.mxu0 0
    %2302 = vmatpush1.bf16.msra.mxu0 %v1539
    %2303 = vmatprep.subr.bf16.mxu0 0
    %2304 = vmatpush1.bf16.msra.mxu0 %v1542
    %2305 = vmatprep.subr.bf16.mxu0 0
    %2306 = vmatpush1.bf16.msra.mxu0 %v1545
    %2307 = vmatprep.subr.bf16.mxu0 0
    %2308 = vmatpush1.bf16.msra.mxu0 %v1548
    %2309 = vmatprep.subr.bf16.mxu0 0
    %2310 = vmatpush1.bf16.msra.mxu0 %v1551
    %2311 = vmatprep.mubr.bf16.mxu0 %v918
    %2312 = vmatmul.mubr.bf16.gmra.mrb[0].mxu0 %v917
    %v2313 = vpop.f32.mrb[0].mxu0
    %v2314 = vadd.f32 %v2129, %v2313
    %v2315 = vpop.f32.mrb[0].mxu0
    %v2316 = vpop.f32.mrb[0].mxu0
    %v2317 = vadd.f32 %v2132, %v2316
    %v2318 = vpop.f32.mrb[0].mxu0
    %2319 = vmatprep.mubr.bf16.mxu0 %v922
    %2320 = vmatmul.mubr.bf16.gmra.mrb[0].mxu0 %v921
    %v2321 = vpop.f32.mrb[0].mxu0
    %v2322 = vadd.f32 %v2137, %v2321
    %v2323 = vpop.f32.mrb[0].mxu0
    %v2324 = vpop.f32.mrb[0].mxu0
    %v2325 = vadd.f32 %v2140, %v2324
    %v2326 = vpop.f32.mrb[0].mxu0
    %2327 = vmatprep.mubr.bf16.mxu0 %v926
    %2328 = vmatmul.mubr.bf16.gmra.mrb[0].mxu0 %v925
    %v2329 = vpop.f32.mrb[0].mxu0
    %v2330 = vadd.f32 %v2145, %v2329
    %v2331 = vpop.f32.mrb[0].mxu0
    %v2332 = vpop.f32.mrb[0].mxu0
    %v2333 = vadd.f32 %v2148, %v2332
    %v2334 = vpop.f32.mrb[0].mxu0
    %2335 = vmatprep.mubr.bf16.mxu0 %v930
    %2336 = vmatmul.mubr.bf16.gmra.mrb[0].mxu0 %v929
    %v2337 = vpop.f32.mrb[0].mxu0
    %v2338 = vadd.f32 %v2153, %v2337
    %v2339 = vpop.f32.mrb[0].mxu0
    %v2340 = vpop.f32.mrb[0].mxu0
    %v2341 = vadd.f32 %v2156, %v2340
    %v2342 = vpop.f32.mrb[0].mxu0
    %2343 = vmatprep.mubr.bf16.mxu0 %v934
    %2344 = vmatmul.mubr.bf16.gmra.mrb[0].mxu0 %v933
    %v2345 = vpop.f32.mrb[0].mxu0
    %v2346 = vadd.f32 %v2161, %v2345
    %v2347 = vpop.f32.mrb[0].mxu0
    %v2348 = vpop.f32.mrb[0].mxu0
    %v2349 = vadd.f32 %v2164, %v2348
    %v2350 = vpop.f32.mrb[0].mxu0
    %2351 = vmatprep.mubr.bf16.mxu0 %v938
    %2352 = vmatmul.mubr.bf16.gmra.mrb[0].mxu0 %v937
    %v2353 = vpop.f32.mrb[0].mxu0
    %v2354 = vadd.f32 %v2169, %v2353
    %v2355 = vpop.f32.mrb[0].mxu0
    %v2356 = vpop.f32.mrb[0].mxu0
    %v2357 = vadd.f32 %v2172, %v2356
    %v2358 = vpop.f32.mrb[0].mxu0
    %2359 = vmatprep.mubr.bf16.mxu0 %v942
    %2360 = vmatmul.mubr.bf16.gmra.mrb[0].mxu0 %v941
    %v2361 = vpop.f32.mrb[0].mxu0
    %v2362 = vadd.f32 %v2177, %v2361
    %v2363 = vpop.f32.mrb[0].mxu0
    %v2364 = vpop.f32.mrb[0].mxu0
    %v2365 = vadd.f32 %v2180, %v2364
    %v2366 = vpop.f32.mrb[0].mxu0
    %2367 = vmatprep.mubr.bf16.mxu0 %v946
    %2368 = vmatmul.mubr.bf16.gmra.mrb[0].mxu0 %v945
    %v2369 = vpop.f32.mrb[0].mxu0
    %v2370 = vadd.f32 %v2185, %v2369
    %v2371 = vpop.f32.mrb[0].mxu0
    %v2372 = vpop.f32.mrb[0].mxu0
    %v2373 = vadd.f32 %v2188, %v2372
    %v2374 = vpop.f32.mrb[0].mxu0
    %2375 = vmatprep.mubr.bf16.mxu0 %v950
    %2376 = vmatmul.mubr.bf16.gmra.mrb[0].mxu0 %v949
    %v2377 = vpop.f32.mrb[0].mxu0
    %v2378 = vadd.f32 %v2193, %v2377
    %v2379 = vpop.f32.mrb[0].mxu0
    %v2380 = vpop.f32.mrb[0].mxu0
    %v2381 = vadd.f32 %v2196, %v2380
    %v2382 = vpop.f32.mrb[0].mxu0
    %2383 = vmatprep.mubr.bf16.mxu0 %v954
    %2384 = vmatmul.mubr.bf16.gmra.mrb[0].mxu0 %v953
    %v2385 = vpop.f32.mrb[0].mxu0
    %v2386 = vadd.f32 %v2201, %v2385
    %v2387 = vpop.f32.mrb[0].mxu0
    %v2388 = vpop.f32.mrb[0].mxu0
    %v2389 = vadd.f32 %v2204, %v2388
    %v2390 = vpop.f32.mrb[0].mxu0
    %2391 = vmatprep.mubr.bf16.mxu0 %v958
    %2392 = vmatmul.mubr.bf16.gmra.mrb[0].mxu0 %v957
    %v2393 = vpop.f32.mrb[0].mxu0
    %v2394 = vadd.f32 %v2209, %v2393
    %v2395 = vpop.f32.mrb[0].mxu0
    %v2396 = vpop.f32.mrb[0].mxu0
    %v2397 = vadd.f32 %v2212, %v2396
    %v2398 = vpop.f32.mrb[0].mxu0
    %2399 = vmatprep.mubr.bf16.mxu0 %v962
    %2400 = vmatmul.mubr.bf16.gmra.mrb[0].mxu0 %v961
    %v2401 = vpop.f32.mrb[0].mxu0
    %v2402 = vadd.f32 %v2217, %v2401
    %v2403 = vpop.f32.mrb[0].mxu0
    %v2404 = vpop.f32.mrb[0].mxu0
    %v2405 = vadd.f32 %v2220, %v2404
    %v2406 = vpop.f32.mrb[0].mxu0
    %2407 = vmatprep.mubr.bf16.mxu0 %v966
    %2408 = vmatmul.mubr.bf16.gmra.mrb[0].mxu0 %v965
    %v2409 = vpop.f32.mrb[0].mxu0
    %v2410 = vadd.f32 %v2225, %v2409
    %v2411 = vpop.f32.mrb[0].mxu0
    %v2412 = vpop.f32.mrb[0].mxu0
    %v2413 = vadd.f32 %v2228, %v2412
    %v2414 = vpop.f32.mrb[0].mxu0
    %2415 = vmatprep.mubr.bf16.mxu0 %v970
    %2416 = vmatmul.mubr.bf16.gmra.mrb[0].mxu0 %v969
    %v2417 = vpop.f32.mrb[0].mxu0
    %v2418 = vadd.f32 %v2233, %v2417
    %v2419 = vpop.f32.mrb[0].mxu0
    %v2420 = vpop.f32.mrb[0].mxu0
    %v2421 = vadd.f32 %v2236, %v2420
    %v2422 = vpop.f32.mrb[0].mxu0
    %2423 = vmatprep.mubr.bf16.mxu0 %v974
    %2424 = vmatmul.mubr.bf16.gmra.mrb[0].mxu0 %v973
    %v2425 = vpop.f32.mrb[0].mxu0
    %v2426 = vadd.f32 %v2241, %v2425
    %v2427 = vpop.f32.mrb[0].mxu0
    %v2428 = vpop.f32.mrb[0].mxu0
    %v2429 = vadd.f32 %v2244, %v2428
    %v2430 = vpop.f32.mrb[0].mxu0
    %2431 = vmatprep.mubr.bf16.mxu0 %v978
    %2432 = vmatmul.mubr.bf16.gmra.mrb[0].mxu0 %v977
    %v2433 = vpop.f32.mrb[0].mxu0
    %v2434 = vadd.f32 %v2249, %v2433
    %v2435 = vpop.f32.mrb[0].mxu0
    %v2436 = vpop.f32.mrb[0].mxu0
    %v2437 = vadd.f32 %v2252, %v2436
    %v2438 = vpop.f32.mrb[0].mxu0
    %2439 = vmatprep.mubr.bf16.mxu0 %v982
    %2440 = vmatmul.mubr.bf16.gmra.mrb[0].mxu0 %v981
    %v2441 = vpop.f32.mrb[0].mxu0
    %v2442 = vadd.f32 %v2257, %v2441
    %v2443 = vpop.f32.mrb[0].mxu0
    %v2444 = vpop.f32.mrb[0].mxu0
    %v2445 = vadd.f32 %v2260, %v2444
    %v2446 = vpop.f32.mrb[0].mxu0
    %2447 = vmatprep.mubr.bf16.mxu0 %v986
    %2448 = vmatmul.mubr.bf16.gmra.mrb[0].mxu0 %v985
    %v2449 = vpop.f32.mrb[0].mxu0
    %v2450 = vadd.f32 %v2265, %v2449
    %v2451 = vpop.f32.mrb[0].mxu0
    %v2452 = vpop.f32.mrb[0].mxu0
    %v2453 = vadd.f32 %v2268, %v2452
    %v2454 = vpop.f32.mrb[0].mxu0
    %2455 = vmatprep.mubr.bf16.mxu0 %v990
    %2456 = vmatmul.mubr.bf16.gmra.mrb[0].mxu0 %v989
    %v2457 = vpop.f32.mrb[0].mxu0
    %v2458 = vadd.f32 %v2273, %v2457
    %v2459 = vpop.f32.mrb[0].mxu0
    %v2460 = vpop.f32.mrb[0].mxu0
    %v2461 = vadd.f32 %v2276, %v2460
    %v2462 = vpop.f32.mrb[0].mxu0
    %2463 = vdwg.mxu0
    %v2464 = vmax.f32 %v1906, 0.0
    %v2465 = vmax.f32 %v1908, 0.0
    %v2466 = vmax.f32 %v2314, 0.0
    %v2467 = vmax.f32 %v1910, 0.0
    %v2468 = vmax.f32 %v1912, 0.0
    %v2469 = vmax.f32 %v2317, 0.0
    %v2470 = vmax.f32 %v1916, 0.0
    %v2471 = vmax.f32 %v1918, 0.0
    %v2472 = vmax.f32 %v2322, 0.0
    %v2473 = vmax.f32 %v1920, 0.0
    %v2474 = vmax.f32 %v1922, 0.0
    %v2475 = vmax.f32 %v2325, 0.0
    %v2476 = vmax.f32 %v1926, 0.0
    %v2477 = vmax.f32 %v1928, 0.0
    %v2478 = vmax.f32 %v2330, 0.0
    %v2479 = vmax.f32 %v1930, 0.0
    %v2480 = vmax.f32 %v1932, 0.0
    %v2481 = vmax.f32 %v2333, 0.0
    %v2482 = vmax.f32 %v1936, 0.0
    %v2483 = vmax.f32 %v1938, 0.0
    %v2484 = vmax.f32 %v2338, 0.0
    %v2485 = vmax.f32 %v1940, 0.0
    %v2486 = vmax.f32 %v1942, 0.0
    %v2487 = vmax.f32 %v2341, 0.0
    %v2488 = vmax.f32 %v1946, 0.0
    %v2489 = vmax.f32 %v1948, 0.0
    %v2490 = vmax.f32 %v2346, 0.0
    %v2491 = vmax.f32 %v1950, 0.0
    %v2492 = vmax.f32 %v1952, 0.0
    %v2493 = vmax.f32 %v2349, 0.0
    %v2494 = vmax.f32 %v1956, 0.0
    %v2495 = vmax.f32 %v1958, 0.0
    %v2496 = vmax.f32 %v2354, 0.0
    %v2497 = vmax.f32 %v1960, 0.0
    %v2498 = vmax.f32 %v1962, 0.0
    %v2499 = vmax.f32 %v2357, 0.0
    %v2500 = vmax.f32 %v1966, 0.0
    %v2501 = vmax.f32 %v1968, 0.0
    %v2502 = vmax.f32 %v2362, 0.0
    %v2503 = vmax.f32 %v1970, 0.0
    %v2504 = vmax.f32 %v1972, 0.0
    %v2505 = vmax.f32 %v2365, 0.0
    %v2506 = vmax.f32 %v1976, 0.0
    %v2507 = vmax.f32 %v1978, 0.0
    %v2508 = vmax.f32 %v2370, 0.0
    %v2509 = vmax.f32 %v1980, 0.0
    %v2510 = vmax.f32 %v1982, 0.0
    %v2511 = vmax.f32 %v2373, 0.0
    %v2512 = vmax.f32 %v1986, 0.0
    %v2513 = vmax.f32 %v1988, 0.0
    %v2514 = vmax.f32 %v2378, 0.0
    %v2515 = vmax.f32 %v1990, 0.0
    %v2516 = vmax.f32 %v1992, 0.0
    %v2517 = vmax.f32 %v2381, 0.0
    %v2518 = vmax.f32 %v1996, 0.0
    %v2519 = vmax.f32 %v1998, 0.0
    %v2520 = vmax.f32 %v2386, 0.0
    %v2521 = vmax.f32 %v2000, 0.0
    %v2522 = vmax.f32 %v2002, 0.0
    %v2523 = vmax.f32 %v2389, 0.0
    %v2524 = vmax.f32 %v2006, 0.0
    %v2525 = vmax.f32 %v2008, 0.0
    %v2526 = vmax.f32 %v2394, 0.0
    %v2527 = vmax.f32 %v2010, 0.0
    %v2528 = vmax.f32 %v2012, 0.0
    %v2529 = vmax.f32 %v2397, 0.0
    %v2530 = vmax.f32 %v2016, 0.0
    %v2531 = vmax.f32 %v2018, 0.0
    %v2532 = vmax.f32 %v2402, 0.0
    %v2533 = vmax.f32 %v2020, 0.0
    %v2534 = vmax.f32 %v2022, 0.0
    %v2535 = vmax.f32 %v2405, 0.0
    %v2536 = vmax.f32 %v2026, 0.0
    %v2537 = vmax.f32 %v2028, 0.0
    %v2538 = vmax.f32 %v2410, 0.0
    %v2539 = vmax.f32 %v2030, 0.0
    %v2540 = vmax.f32 %v2032, 0.0
    %v2541 = vmax.f32 %v2413, 0.0
    %v2542 = vmax.f32 %v2036, 0.0
    %v2543 = vmax.f32 %v2038, 0.0
    %v2544 = vmax.f32 %v2418, 0.0
    %v2545 = vmax.f32 %v2040, 0.0
    %v2546 = vmax.f32 %v2042, 0.0
    %v2547 = vmax.f32 %v2421, 0.0
    %v2548 = vmax.f32 %v2046, 0.0
    %v2549 = vmax.f32 %v2048, 0.0
    %v2550 = vmax.f32 %v2426, 0.0
    %v2551 = vmax.f32 %v2050, 0.0
    %v2552 = vmax.f32 %v2052, 0.0
    %v2553 = vmax.f32 %v2429, 0.0
    %v2554 = vmax.f32 %v2056, 0.0
    %v2555 = vmax.f32 %v2058, 0.0
    %v2556 = vmax.f32 %v2434, 0.0
    %v2557 = vmax.f32 %v2060, 0.0
    %v2558 = vmax.f32 %v2062, 0.0
    %v2559 = vmax.f32 %v2437, 0.0
    %v2560 = vmax.f32 %v2066, 0.0
    %v2561 = vmax.f32 %v2068, 0.0
    %v2562 = vmax.f32 %v2442, 0.0
    %v2563 = vmax.f32 %v2070, 0.0
    %v2564 = vmax.f32 %v2072, 0.0
    %v2565 = vmax.f32 %v2445, 0.0
    %v2566 = vmax.f32 %v2076, 0.0
    %v2567 = vmax.f32 %v2078, 0.0
    %v2568 = vmax.f32 %v2450, 0.0
    %v2569 = vmax.f32 %v2080, 0.0
    %v2570 = vmax.f32 %v2082, 0.0
    %v2571 = vmax.f32 %v2453, 0.0
    %v2572 = vmax.f32 %v2086, 0.0
    %v2573 = vmax.f32 %v2088, 0.0
    %v2574 = vmax.f32 %v2458, 0.0
    %v2575 = vmax.f32 %v2090, 0.0
    %v2576 = vmax.f32 %v2092, 0.0
    %v2577 = vmax.f32 %v2461, 0.0
    %v2578 = vpack.c.bf16 %v2467, %v2464
    %v2579 = vpack.c.bf16 %v2468, %v2465
    %v2580 = vpack.c.bf16 %v2469, %v2466
    %v2581 = vpack.c.bf16 %v2473, %v2470
    %v2582 = vpack.c.bf16 %v2474, %v2471
    %v2583 = vpack.c.bf16 %v2475, %v2472
    %v2584 = vpack.c.bf16 %v2479, %v2476
    %v2585 = vpack.c.bf16 %v2480, %v2477
    %v2586 = vpack.c.bf16 %v2481, %v2478
    %v2587 = vpack.c.bf16 %v2485, %v2482
    %v2588 = vpack.c.bf16 %v2486, %v2483
    %v2589 = vpack.c.bf16 %v2487, %v2484
    %v2590 = vpack.c.bf16 %v2491, %v2488
    %v2591 = vpack.c.bf16 %v2492, %v2489
    %v2592 = vpack.c.bf16 %v2493, %v2490
    %v2593 = vpack.c.bf16 %v2497, %v2494
    %v2594 = vpack.c.bf16 %v2498, %v2495
    %v2595 = vpack.c.bf16 %v2499, %v2496
    %v2596 = vpack.c.bf16 %v2503, %v2500
    %v2597 = vpack.c.bf16 %v2504, %v2501
    %v2598 = vpack.c.bf16 %v2505, %v2502
    %v2599 = vpack.c.bf16 %v2509, %v2506
    %v2600 = vpack.c.bf16 %v2510, %v2507
    %v2601 = vpack.c.bf16 %v2511, %v2508
    %v2602 = vpack.c.bf16 %v2515, %v2512
    %v2603 = vpack.c.bf16 %v2516, %v2513
    %v2604 = vpack.c.bf16 %v2517, %v2514
    %v2605 = vpack.c.bf16 %v2521, %v2518
    %v2606 = vpack.c.bf16 %v2522, %v2519
    %v2607 = vpack.c.bf16 %v2523, %v2520
    %v2608 = vpack.c.bf16 %v2527, %v2524
    %v2609 = vpack.c.bf16 %v2528, %v2525
    %v2610 = vpack.c.bf16 %v2529, %v2526
    %v2611 = vpack.c.bf16 %v2533, %v2530
    %v2612 = vpack.c.bf16 %v2534, %v2531
    %v2613 = vpack.c.bf16 %v2535, %v2532
    %v2614 = vpack.c.bf16 %v2539, %v2536
    %v2615 = vpack.c.bf16 %v2540, %v2537
    %v2616 = vpack.c.bf16 %v2541, %v2538
    %v2617 = vpack.c.bf16 %v2545, %v2542
    %v2618 = vpack.c.bf16 %v2546, %v2543
    %v2619 = vpack.c.bf16 %v2547, %v2544
    %v2620 = vpack.c.bf16 %v2551, %v2548
    %v2621 = vpack.c.bf16 %v2552, %v2549
    %v2622 = vpack.c.bf16 %v2553, %v2550
    %v2623 = vpack.c.bf16 %v2557, %v2554
    %v2624 = vpack.c.bf16 %v2558, %v2555
    %v2625 = vpack.c.bf16 %v2559, %v2556
    %v2626 = vpack.c.bf16 %v2563, %v2560
    %v2627 = vpack.c.bf16 %v2564, %v2561
    %v2628 = vpack.c.bf16 %v2565, %v2562
    %v2629 = vpack.c.bf16 %v2569, %v2566
    %v2630 = vpack.c.bf16 %v2570, %v2567
    %v2631 = vpack.c.bf16 %v2571, %v2568
    %v2632 = vpack.c.bf16 %v2575, %v2572
    %v2633 = vpack.c.bf16 %v2576, %v2573
    %v2634 = vpack.c.bf16 %v2577, %v2574
    %v2635 = vld [vmem:[%s5] sm:$0xf]
    %v2636 = vld [vmem:[%s5 + $0x4] sm:$0xf]
    %v2637 = vld [vmem:[%s5 + $0x8] sm:$0xf]
    %v2638 = vld [vmem:[%s5 + $0xc] sm:$0xf]
    %v2639 = vld [vmem:[%s5 + $0x10] sm:$0xf]
    %v2640 = vld [vmem:[%s5 + $0x14] sm:$0xf]
    %v2641 = vld [vmem:[%s5 + $0x18] sm:$0xf]
    %v2642 = vld [vmem:[%s5 + $0x1c] sm:$0xf]
    %v2643 = vld [vmem:[%s5 + $0x20] sm:$0xf]
    %v2644 = vld [vmem:[%s5 + $0x24] sm:$0xf]
    %v2645 = vld [vmem:[%s5 + $0x28] sm:$0xf]
    %v2646 = vld [vmem:[%s5 + $0x2c] sm:$0xf]
    %v2647 = vld [vmem:[%s5 + $0x30] sm:$0xf]
    %v2648 = vld [vmem:[%s5 + $0x34] sm:$0xf]
    %v2649 = vld [vmem:[%s5 + $0x38] sm:$0xf]
    %v2650 = vld [vmem:[%s5 + $0x3c] sm:$0xf]
    %v2651 = vld [vmem:[%s5 + $0x40] sm:$0xf]
    %v2652 = vld [vmem:[%s5 + $0x44] sm:$0xf]
    %v2653 = vld [vmem:[%s5 + $0x48] sm:$0xf]
    %v2654 = vld [vmem:[%s5 + $0x4c] sm:$0xf]
    %v2655 = vld [vmem:[%s5 + $0x50] sm:$0xf]
    %v2656 = vld [vmem:[%s5 + $0x54] sm:$0xf]
    %v2657 = vld [vmem:[%s5 + $0x58] sm:$0xf]
    %v2658 = vld [vmem:[%s5 + $0x5c] sm:$0xf]
    %v2659 = vld [vmem:[%s5 + $0x60] sm:$0xf]
    %v2660 = vld [vmem:[%s5 + $0x64] sm:$0xf]
    %v2661 = vld [vmem:[%s5 + $0x68] sm:$0xf]
    %v2662 = vld [vmem:[%s5 + $0x6c] sm:$0xf]
    %v2663 = vld [vmem:[%s5 + $0x70] sm:$0xf]
    %v2664 = vld [vmem:[%s5 + $0x74] sm:$0xf]
    %v2665 = vld [vmem:[%s5 + $0x78] sm:$0xf]
    %v2666 = vld [vmem:[%s5 + $0x7c] sm:$0xf]
    %v2667 = vld [vmem:[%s5 + $0x80] sm:$0xf]
    %v2668 = vld [vmem:[%s5 + $0x84] sm:$0xf]
    %v2669 = vld [vmem:[%s5 + $0x88] sm:$0xf]
    %v2670 = vld [vmem:[%s5 + $0x8c] sm:$0xf]
    %v2671 = vld [vmem:[%s5 + $0x90] sm:$0xf]
    %v2672 = vld [vmem:[%s5 + $0x94] sm:$0xf]
    %v2673 = vld [vmem:[%s5 + $0x98] sm:$0xf]
    %v2674 = vld [vmem:[%s5 + $0x9c] sm:$0xf]
    %v2675 = vld [vmem:[%s5 + $0xa0] sm:$0xf]
    %v2676 = vld [vmem:[%s5 + $0xa4] sm:$0xf]
    %v2677 = vld [vmem:[%s5 + $0xa8] sm:$0xf]
    %v2678 = vld [vmem:[%s5 + $0xac] sm:$0xf]
    %v2679 = vld [vmem:[%s5 + $0xb0] sm:$0xf]
    %v2680 = vld [vmem:[%s5 + $0xb4] sm:$0xf]
    %v2681 = vld [vmem:[%s5 + $0xb8] sm:$0xf]
    %v2682 = vld [vmem:[%s5 + $0xbc] sm:$0xf]
    %v2683 = vld [vmem:[%s6] sm:$0x1]
    %v2685 = vlaneseq
    %v2686 = vshrl.u32 %v2685, 7
    %v2687 = vsub.s32 0, %v2686
    %v2688 = vrot.slane %v2683, %v2687
    %v2738 = vunpack.c.l.b16 %v2635
    %v2739 = vunpack.c.l.b16 %v2636
    %v2740 = vunpack.c.l.b16 %v2637
    %v2741 = vunpack.c.l.b16 %v2638
    %v2742 = vunpack.c.l.b16 %v2639
    %v2743 = vunpack.c.l.b16 %v2640
    %v2744 = vunpack.c.l.b16 %v2641
    %v2745 = vunpack.c.l.b16 %v2642
    %v2746 = vunpack.c.l.b16 %v2643
    %v2747 = vunpack.c.l.b16 %v2644
    %v2748 = vunpack.c.l.b16 %v2645
    %v2749 = vunpack.c.l.b16 %v2646
    %v2750 = vunpack.c.l.b16 %v2647
    %v2751 = vunpack.c.l.b16 %v2648
    %v2752 = vunpack.c.l.b16 %v2649
    %v2753 = vunpack.c.l.b16 %v2650
    %v2754 = vunpack.c.l.b16 %v2651
    %v2755 = vunpack.c.l.b16 %v2652
    %v2756 = vunpack.c.l.b16 %v2653
    %v2757 = vunpack.c.l.b16 %v2654
    %v2758 = vunpack.c.l.b16 %v2655
    %v2759 = vunpack.c.l.b16 %v2656
    %v2760 = vunpack.c.l.b16 %v2657
    %v2761 = vunpack.c.l.b16 %v2658
    %v2762 = vunpack.c.l.b16 %v2659
    %v2763 = vunpack.c.l.b16 %v2660
    %v2764 = vunpack.c.l.b16 %v2661
    %v2765 = vunpack.c.l.b16 %v2662
    %v2766 = vunpack.c.l.b16 %v2663
    %v2767 = vunpack.c.l.b16 %v2664
    %v2768 = vunpack.c.l.b16 %v2665
    %v2769 = vunpack.c.l.b16 %v2666
    %v2770 = vunpack.c.l.b16 %v2667
    %v2771 = vunpack.c.l.b16 %v2668
    %v2772 = vunpack.c.l.b16 %v2669
    %v2773 = vunpack.c.l.b16 %v2670
    %v2774 = vunpack.c.l.b16 %v2671
    %v2775 = vunpack.c.l.b16 %v2672
    %v2776 = vunpack.c.l.b16 %v2673
    %v2777 = vunpack.c.l.b16 %v2674
    %v2778 = vunpack.c.l.b16 %v2675
    %v2779 = vunpack.c.l.b16 %v2676
    %v2780 = vunpack.c.l.b16 %v2677
    %v2781 = vunpack.c.l.b16 %v2678
    %v2782 = vunpack.c.l.b16 %v2679
    %v2783 = vunpack.c.l.b16 %v2680
    %v2784 = vunpack.c.l.b16 %v2681
    %v2785 = vunpack.c.l.b16 %v2682
    %v2786 = vpack.c.b16 %v2739, %v2738
    %v2787 = vpack.c.b16 %v2741, %v2740
    %v2788 = vpack.c.b16 %v2743, %v2742
    %v2789 = vpack.c.b16 %v2745, %v2744
    %v2790 = vpack.c.b16 %v2747, %v2746
    %v2791 = vpack.c.b16 %v2749, %v2748
    %v2792 = vpack.c.b16 %v2751, %v2750
    %v2793 = vpack.c.b16 %v2753, %v2752
    %v2794 = vpack.c.b16 %v2755, %v2754
    %v2795 = vpack.c.b16 %v2757, %v2756
    %v2796 = vpack.c.b16 %v2759, %v2758
    %v2797 = vpack.c.b16 %v2761, %v2760
    %v2798 = vpack.c.b16 %v2763, %v2762
    %v2799 = vpack.c.b16 %v2765, %v2764
    %v2800 = vpack.c.b16 %v2767, %v2766
    %v2801 = vpack.c.b16 %v2769, %v2768
    %v2802 = vpack.c.b16 %v2771, %v2770
    %v2803 = vpack.c.b16 %v2773, %v2772
    %v2804 = vpack.c.b16 %v2775, %v2774
    %v2805 = vpack.c.b16 %v2777, %v2776
    %v2806 = vpack.c.b16 %v2779, %v2778
    %v2807 = vpack.c.b16 %v2781, %v2780
    %v2808 = vpack.c.b16 %v2783, %v2782
    %v2809 = vpack.c.b16 %v2785, %v2784
    %2834 = vmatprep.subr.bf16.mxu0 0
    %2835 = vmatpush1.bf16.msra.mxu0 %v2786
    %2836 = vmatprep.subr.bf16.mxu0 0
    %2837 = vmatpush1.bf16.msra.mxu0 %v2787
    %2838 = vmatprep.subr.bf16.mxu0 0
    %2839 = vmatpush1.bf16.msra.mxu0 %v2788
    %2840 = vmatprep.subr.bf16.mxu0 0
    %2841 = vmatpush1.bf16.msra.mxu0 %v2789
    %2842 = vmatprep.subr.bf16.mxu0 0
    %2843 = vmatpush1.bf16.msra.mxu0 %v2790
    %2844 = vmatprep.subr.bf16.mxu0 0
    %2845 = vmatpush1.bf16.msra.mxu0 %v2791
    %2846 = vmatprep.subr.bf16.mxu0 0
    %2847 = vmatpush1.bf16.msra.mxu0 %v2792
    %2848 = vmatprep.subr.bf16.mxu0 0
    %2849 = vmatpush1.bf16.msra.mxu0 %v2793
    %2850 = vmatprep.subr.bf16.mxu0 0
    %2851 = vmatpush1.bf16.msra.mxu0 %v2794
    %2852 = vmatprep.subr.bf16.mxu0 0
    %2853 = vmatpush1.bf16.msra.mxu0 %v2795
    %2854 = vmatprep.subr.bf16.mxu0 0
    %2855 = vmatpush1.bf16.msra.mxu0 %v2796
    %2856 = vmatprep.subr.bf16.mxu0 0
    %2857 = vmatpush1.bf16.msra.mxu0 %v2797
    %2858 = vmatprep.subr.bf16.mxu0 0
    %2859 = vmatpush1.bf16.msra.mxu0 %v2798
    %2860 = vmatprep.subr.bf16.mxu0 0
    %2861 = vmatpush1.bf16.msra.mxu0 %v2799
    %2862 = vmatprep.subr.bf16.mxu0 0
    %2863 = vmatpush1.bf16.msra.mxu0 %v2800
    %2864 = vmatprep.subr.bf16.mxu0 0
    %2865 = vmatpush1.bf16.msra.mxu0 %v2801
    %2866 = vmatprep.mubr.bf16.mxu0 %v2579
    %2867 = vmatmul.mubr.bf16.gmra.mrb[0].mxu0 %v2578
    %v2868 = vpop.f32.mrb[0].mxu0
    %v2869 = vadd.f32 %v2688, %v2868
    %v2870 = vpop.f32.mrb[0].mxu0
    %v2871 = vpop.f32.mrb[0].mxu0
    %v2872 = vadd.f32 %v2688, %v2871
    %v2873 = vpop.f32.mrb[0].mxu0
    %2874 = vmatprep.mubr.bf16.mxu0 %v2582
    %2875 = vmatmul.mubr.bf16.gmra.mrb[0].mxu0 %v2581
    %v2876 = vpop.f32.mrb[0].mxu0
    %v2877 = vadd.f32 %v2688, %v2876
    %v2878 = vpop.f32.mrb[0].mxu0
    %v2879 = vpop.f32.mrb[0].mxu0
    %v2880 = vadd.f32 %v2688, %v2879
    %v2881 = vpop.f32.mrb[0].mxu0
    %2882 = vmatprep.mubr.bf16.mxu0 %v2585
    %2883 = vmatmul.mubr.bf16.gmra.mrb[0].mxu0 %v2584
    %v2884 = vpop.f32.mrb[0].mxu0
    %v2885 = vadd.f32 %v2688, %v2884
    %v2886 = vpop.f32.mrb[0].mxu0
    %v2887 = vpop.f32.mrb[0].mxu0
    %v2888 = vadd.f32 %v2688, %v2887
    %v2889 = vpop.f32.mrb[0].mxu0
    %2890 = vmatprep.mubr.bf16.mxu0 %v2588
    %2891 = vmatmul.mubr.bf16.gmra.mrb[0].mxu0 %v2587
    %v2892 = vpop.f32.mrb[0].mxu0
    %v2893 = vadd.f32 %v2688, %v2892
    %v2894 = vpop.f32.mrb[0].mxu0
    %v2895 = vpop.f32.mrb[0].mxu0
    %v2896 = vadd.f32 %v2688, %v2895
    %v2897 = vpop.f32.mrb[0].mxu0
    %2898 = vmatprep.mubr.bf16.mxu0 %v2591
    %2899 = vmatmul.mubr.bf16.gmra.mrb[0].mxu0 %v2590
    %v2900 = vpop.f32.mrb[0].mxu0
    %v2901 = vadd.f32 %v2688, %v2900
    %v2902 = vpop.f32.mrb[0].mxu0
    %v2903 = vpop.f32.mrb[0].mxu0
    %v2904 = vadd.f32 %v2688, %v2903
    %v2905 = vpop.f32.mrb[0].mxu0
    %2906 = vmatprep.mubr.bf16.mxu0 %v2594
    %2907 = vmatmul.mubr.bf16.gmra.mrb[0].mxu0 %v2593
    %v2908 = vpop.f32.mrb[0].mxu0
    %v2909 = vadd.f32 %v2688, %v2908
    %v2910 = vpop.f32.mrb[0].mxu0
    %v2911 = vpop.f32.mrb[0].mxu0
    %v2912 = vadd.f32 %v2688, %v2911
    %v2913 = vpop.f32.mrb[0].mxu0
    %2914 = vmatprep.mubr.bf16.mxu0 %v2597
    %2915 = vmatmul.mubr.bf16.gmra.mrb[0].mxu0 %v2596
    %v2916 = vpop.f32.mrb[0].mxu0
    %v2917 = vadd.f32 %v2688, %v2916
    %v2918 = vpop.f32.mrb[0].mxu0
    %v2919 = vpop.f32.mrb[0].mxu0
    %v2920 = vadd.f32 %v2688, %v2919
    %v2921 = vpop.f32.mrb[0].mxu0
    %2922 = vmatprep.mubr.bf16.mxu0 %v2600
    %2923 = vmatmul.mubr.bf16.gmra.mrb[0].mxu0 %v2599
    %v2924 = vpop.f32.mrb[0].mxu0
    %v2925 = vadd.f32 %v2688, %v2924
    %v2926 = vpop.f32.mrb[0].mxu0
    %v2927 = vpop.f32.mrb[0].mxu0
    %v2928 = vadd.f32 %v2688, %v2927
    %v2929 = vpop.f32.mrb[0].mxu0
    %2930 = vmatprep.mubr.bf16.mxu0 %v2603
    %2931 = vmatmul.mubr.bf16.gmra.mrb[0].mxu0 %v2602
    %v2932 = vpop.f32.mrb[0].mxu0
    %v2933 = vadd.f32 %v2688, %v2932
    %v2934 = vpop.f32.mrb[0].mxu0
    %v2935 = vpop.f32.mrb[0].mxu0
    %v2936 = vadd.f32 %v2688, %v2935
    %v2937 = vpop.f32.mrb[0].mxu0
    %2938 = vmatprep.mubr.bf16.mxu0 %v2606
    %2939 = vmatmul.mubr.bf16.gmra.mrb[0].mxu0 %v2605
    %v2940 = vpop.f32.mrb[0].mxu0
    %v2941 = vadd.f32 %v2688, %v2940
    %v2942 = vpop.f32.mrb[0].mxu0
    %v2943 = vpop.f32.mrb[0].mxu0
    %v2944 = vadd.f32 %v2688, %v2943
    %v2945 = vpop.f32.mrb[0].mxu0
    %2946 = vmatprep.mubr.bf16.mxu0 %v2609
    %2947 = vmatmul.mubr.bf16.gmra.mrb[0].mxu0 %v2608
    %v2948 = vpop.f32.mrb[0].mxu0
    %v2949 = vadd.f32 %v2688, %v2948
    %v2950 = vpop.f32.mrb[0].mxu0
    %v2951 = vpop.f32.mrb[0].mxu0
    %v2952 = vadd.f32 %v2688, %v2951
    %v2953 = vpop.f32.mrb[0].mxu0
    %2954 = vmatprep.mubr.bf16.mxu0 %v2612
    %2955 = vmatmul.mubr.bf16.gmra.mrb[0].mxu0 %v2611
    %v2956 = vpop.f32.mrb[0].mxu0
    %v2957 = vadd.f32 %v2688, %v2956
    %v2958 = vpop.f32.mrb[0].mxu0
    %v2959 = vpop.f32.mrb[0].mxu0
    %v2960 = vadd.f32 %v2688, %v2959
    %v2961 = vpop.f32.mrb[0].mxu0
    %2962 = vmatprep.mubr.bf16.mxu0 %v2615
    %2963 = vmatmul.mubr.bf16.gmra.mrb[0].mxu0 %v2614
    %v2964 = vpop.f32.mrb[0].mxu0
    %v2965 = vadd.f32 %v2688, %v2964
    %v2966 = vpop.f32.mrb[0].mxu0
    %v2967 = vpop.f32.mrb[0].mxu0
    %v2968 = vadd.f32 %v2688, %v2967
    %v2969 = vpop.f32.mrb[0].mxu0
    %2970 = vmatprep.mubr.bf16.mxu0 %v2618
    %2971 = vmatmul.mubr.bf16.gmra.mrb[0].mxu0 %v2617
    %v2972 = vpop.f32.mrb[0].mxu0
    %v2973 = vadd.f32 %v2688, %v2972
    %v2974 = vpop.f32.mrb[0].mxu0
    %v2975 = vpop.f32.mrb[0].mxu0
    %v2976 = vadd.f32 %v2688, %v2975
    %v2977 = vpop.f32.mrb[0].mxu0
    %2978 = vmatprep.mubr.bf16.mxu0 %v2621
    %2979 = vmatmul.mubr.bf16.gmra.mrb[0].mxu0 %v2620
    %v2980 = vpop.f32.mrb[0].mxu0
    %v2981 = vadd.f32 %v2688, %v2980
    %v2982 = vpop.f32.mrb[0].mxu0
    %v2983 = vpop.f32.mrb[0].mxu0
    %v2984 = vadd.f32 %v2688, %v2983
    %v2985 = vpop.f32.mrb[0].mxu0
    %2986 = vmatprep.mubr.bf16.mxu0 %v2624
    %2987 = vmatmul.mubr.bf16.gmra.mrb[0].mxu0 %v2623
    %v2988 = vpop.f32.mrb[0].mxu0
    %v2989 = vadd.f32 %v2688, %v2988
    %v2990 = vpop.f32.mrb[0].mxu0
    %v2991 = vpop.f32.mrb[0].mxu0
    %v2992 = vadd.f32 %v2688, %v2991
    %v2993 = vpop.f32.mrb[0].mxu0
    %2994 = vmatprep.mubr.bf16.mxu0 %v2627
    %2995 = vmatmul.mubr.bf16.gmra.mrb[0].mxu0 %v2626
    %v2996 = vpop.f32.mrb[0].mxu0
    %v2997 = vadd.f32 %v2688, %v2996
    %v2998 = vpop.f32.mrb[0].mxu0
    %v2999 = vpop.f32.mrb[0].mxu0
    %v3000 = vadd.f32 %v2688, %v2999
    %v3001 = vpop.f32.mrb[0].mxu0
    %3002 = vmatprep.mubr.bf16.mxu0 %v2630
    %3003 = vmatmul.mubr.bf16.gmra.mrb[0].mxu0 %v2629
    %v3004 = vpop.f32.mrb[0].mxu0
    %v3005 = vadd.f32 %v2688, %v3004
    %v3006 = vpop.f32.mrb[0].mxu0
    %v3007 = vpop.f32.mrb[0].mxu0
    %v3008 = vadd.f32 %v2688, %v3007
    %v3009 = vpop.f32.mrb[0].mxu0
    %3010 = vmatprep.mubr.bf16.mxu0 %v2633
    %3011 = vmatmul.mubr.bf16.gmra.mrb[0].mxu0 %v2632
    %v3012 = vpop.f32.mrb[0].mxu0
    %v3013 = vadd.f32 %v2688, %v3012
    %v3014 = vpop.f32.mrb[0].mxu0
    %v3015 = vpop.f32.mrb[0].mxu0
    %v3016 = vadd.f32 %v2688, %v3015
    %v3017 = vpop.f32.mrb[0].mxu0
    %3018 = vdwg.mxu0
    %3019 = vmatprep.subr.bf16.mxu0 0
    %3020 = vmatpush1.bf16.msra.mxu0 %v2802
    %3021 = vmatprep.subr.bf16.mxu0 0
    %3022 = vmatpush1.bf16.msra.mxu0 %v2803
    %3023 = vmatprep.subr.bf16.mxu0 0
    %3024 = vmatpush1.bf16.msra.mxu0 %v2804
    %3025 = vmatprep.subr.bf16.mxu0 0
    %3026 = vmatpush1.bf16.msra.mxu0 %v2805
    %3027 = vmatprep.subr.bf16.mxu0 0
    %3028 = vmatpush1.bf16.msra.mxu0 %v2806
    %3029 = vmatprep.subr.bf16.mxu0 0
    %3030 = vmatpush1.bf16.msra.mxu0 %v2807
    %3031 = vmatprep.subr.bf16.mxu0 0
    %3032 = vmatpush1.bf16.msra.mxu0 %v2808
    %3033 = vmatprep.subr.bf16.mxu0 0
    %3034 = vmatpush1.bf16.msra.mxu0 %v2809
    %3035 = vmatprep.subr.bf16.mxu0 0
    %3036 = vmatpush1.bf16.msra.mxu0 0
    %3037 = vmatprep.subr.bf16.mxu0 0
    %3038 = vmatpush1.bf16.msra.mxu0 0
    %3039 = vmatprep.subr.bf16.mxu0 0
    %3040 = vmatpush1.bf16.msra.mxu0 0
    %3041 = vmatprep.subr.bf16.mxu0 0
    %3042 = vmatpush1.bf16.msra.mxu0 0
    %3043 = vmatprep.subr.bf16.mxu0 0
    %3044 = vmatpush1.bf16.msra.mxu0 0
    %3045 = vmatprep.subr.bf16.mxu0 0
    %3046 = vmatpush1.bf16.msra.mxu0 0
    %3047 = vmatprep.subr.bf16.mxu0 0
    %3048 = vmatpush1.bf16.msra.mxu0 0
    %3049 = vmatprep.subr.bf16.mxu0 0
    %3050 = vmatpush1.bf16.msra.mxu0 0
    %3051 = vmatprep.mubr.bf16.mxu0 0
    %3052 = vmatmul.mubr.bf16.gmra.mrb[0].mxu0 %v2580
    %v3053 = vpop.f32.mrb[0].mxu0
    %v3054 = vadd.f32 %v2869, %v3053
    %v3055 = vpop.f32.mrb[0].mxu0
    %v3056 = vpop.f32.mrb[0].mxu0
    %v3057 = vadd.f32 %v2872, %v3056
    %v3058 = vpop.f32.mrb[0].mxu0
    %3059 = vmatprep.mubr.bf16.mxu0 0
    %3060 = vmatmul.mubr.bf16.gmra.mrb[0].mxu0 %v2583
    %v3061 = vpop.f32.mrb[0].mxu0
    %v3062 = vadd.f32 %v2877, %v3061
    %v3063 = vpop.f32.mrb[0].mxu0
    %v3064 = vpop.f32.mrb[0].mxu0
    %v3065 = vadd.f32 %v2880, %v3064
    %v3066 = vpop.f32.mrb[0].mxu0
    %3067 = vmatprep.mubr.bf16.mxu0 0
    %3068 = vmatmul.mubr.bf16.gmra.mrb[0].mxu0 %v2586
    %v3069 = vpop.f32.mrb[0].mxu0
    %v3070 = vadd.f32 %v2885, %v3069
    %v3071 = vpop.f32.mrb[0].mxu0
    %v3072 = vpop.f32.mrb[0].mxu0
    %v3073 = vadd.f32 %v2888, %v3072
    %v3074 = vpop.f32.mrb[0].mxu0
    %3075 = vmatprep.mubr.bf16.mxu0 0
    %3076 = vmatmul.mubr.bf16.gmra.mrb[0].mxu0 %v2589
    %v3077 = vpop.f32.mrb[0].mxu0
    %v3078 = vadd.f32 %v2893, %v3077
    %v3079 = vpop.f32.mrb[0].mxu0
    %v3080 = vpop.f32.mrb[0].mxu0
    %v3081 = vadd.f32 %v2896, %v3080
    %v3082 = vpop.f32.mrb[0].mxu0
    %3083 = vmatprep.mubr.bf16.mxu0 0
    %3084 = vmatmul.mubr.bf16.gmra.mrb[0].mxu0 %v2592
    %v3085 = vpop.f32.mrb[0].mxu0
    %v3086 = vadd.f32 %v2901, %v3085
    %v3087 = vpop.f32.mrb[0].mxu0
    %v3088 = vpop.f32.mrb[0].mxu0
    %v3089 = vadd.f32 %v2904, %v3088
    %v3090 = vpop.f32.mrb[0].mxu0
    %3091 = vmatprep.mubr.bf16.mxu0 0
    %3092 = vmatmul.mubr.bf16.gmra.mrb[0].mxu0 %v2595
    %v3093 = vpop.f32.mrb[0].mxu0
    %v3094 = vadd.f32 %v2909, %v3093
    %v3095 = vpop.f32.mrb[0].mxu0
    %v3096 = vpop.f32.mrb[0].mxu0
    %v3097 = vadd.f32 %v2912, %v3096
    %v3098 = vpop.f32.mrb[0].mxu0
    %3099 = vmatprep.mubr.bf16.mxu0 0
    %3100 = vmatmul.mubr.bf16.gmra.mrb[0].mxu0 %v2598
    %v3101 = vpop.f32.mrb[0].mxu0
    %v3102 = vadd.f32 %v2917, %v3101
    %v3103 = vpop.f32.mrb[0].mxu0
    %v3104 = vpop.f32.mrb[0].mxu0
    %v3105 = vadd.f32 %v2920, %v3104
    %v3106 = vpop.f32.mrb[0].mxu0
    %3107 = vmatprep.mubr.bf16.mxu0 0
    %3108 = vmatmul.mubr.bf16.gmra.mrb[0].mxu0 %v2601
    %v3109 = vpop.f32.mrb[0].mxu0
    %v3110 = vadd.f32 %v2925, %v3109
    %v3111 = vpop.f32.mrb[0].mxu0
    %v3112 = vpop.f32.mrb[0].mxu0
    %v3113 = vadd.f32 %v2928, %v3112
    %v3114 = vpop.f32.mrb[0].mxu0
    %3115 = vmatprep.mubr.bf16.mxu0 0
    %3116 = vmatmul.mubr.bf16.gmra.mrb[0].mxu0 %v2604
    %v3117 = vpop.f32.mrb[0].mxu0
    %v3118 = vadd.f32 %v2933, %v3117
    %v3119 = vpop.f32.mrb[0].mxu0
    %v3120 = vpop.f32.mrb[0].mxu0
    %v3121 = vadd.f32 %v2936, %v3120
    %v3122 = vpop.f32.mrb[0].mxu0
    %3123 = vmatprep.mubr.bf16.mxu0 0
    %3124 = vmatmul.mubr.bf16.gmra.mrb[0].mxu0 %v2607
    %v3125 = vpop.f32.mrb[0].mxu0
    %v3126 = vadd.f32 %v2941, %v3125
    %v3127 = vpop.f32.mrb[0].mxu0
    %v3128 = vpop.f32.mrb[0].mxu0
    %v3129 = vadd.f32 %v2944, %v3128
    %v3130 = vpop.f32.mrb[0].mxu0
    %3131 = vmatprep.mubr.bf16.mxu0 0
    %3132 = vmatmul.mubr.bf16.gmra.mrb[0].mxu0 %v2610
    %v3133 = vpop.f32.mrb[0].mxu0
    %v3134 = vadd.f32 %v2949, %v3133
    %v3135 = vpop.f32.mrb[0].mxu0
    %v3136 = vpop.f32.mrb[0].mxu0
    %v3137 = vadd.f32 %v2952, %v3136
    %v3138 = vpop.f32.mrb[0].mxu0
    %3139 = vmatprep.mubr.bf16.mxu0 0
    %3140 = vmatmul.mubr.bf16.gmra.mrb[0].mxu0 %v2613
    %v3141 = vpop.f32.mrb[0].mxu0
    %v3142 = vadd.f32 %v2957, %v3141
    %v3143 = vpop.f32.mrb[0].mxu0
    %v3144 = vpop.f32.mrb[0].mxu0
    %v3145 = vadd.f32 %v2960, %v3144
    %v3146 = vpop.f32.mrb[0].mxu0
    %3147 = vmatprep.mubr.bf16.mxu0 0
    %3148 = vmatmul.mubr.bf16.gmra.mrb[0].mxu0 %v2616
    %v3149 = vpop.f32.mrb[0].mxu0
    %v3150 = vadd.f32 %v2965, %v3149
    %v3151 = vpop.f32.mrb[0].mxu0
    %v3152 = vpop.f32.mrb[0].mxu0
    %v3153 = vadd.f32 %v2968, %v3152
    %v3154 = vpop.f32.mrb[0].mxu0
    %3155 = vmatprep.mubr.bf16.mxu0 0
    %3156 = vmatmul.mubr.bf16.gmra.mrb[0].mxu0 %v2619
    %v3157 = vpop.f32.mrb[0].mxu0
    %v3158 = vadd.f32 %v2973, %v3157
    %v3159 = vpop.f32.mrb[0].mxu0
    %v3160 = vpop.f32.mrb[0].mxu0
    %v3161 = vadd.f32 %v2976, %v3160
    %v3162 = vpop.f32.mrb[0].mxu0
    %3163 = vmatprep.mubr.bf16.mxu0 0
    %3164 = vmatmul.mubr.bf16.gmra.mrb[0].mxu0 %v2622
    %v3165 = vpop.f32.mrb[0].mxu0
    %v3166 = vadd.f32 %v2981, %v3165
    %v3167 = vpop.f32.mrb[0].mxu0
    %v3168 = vpop.f32.mrb[0].mxu0
    %v3169 = vadd.f32 %v2984, %v3168
    %v3170 = vpop.f32.mrb[0].mxu0
    %3171 = vmatprep.mubr.bf16.mxu0 0
    %3172 = vmatmul.mubr.bf16.gmra.mrb[0].mxu0 %v2625
    %v3173 = vpop.f32.mrb[0].mxu0
    %v3174 = vadd.f32 %v2989, %v3173
    %v3175 = vpop.f32.mrb[0].mxu0
    %v3176 = vpop.f32.mrb[0].mxu0
    %v3177 = vadd.f32 %v2992, %v3176
    %v3178 = vpop.f32.mrb[0].mxu0
    %3179 = vmatprep.mubr.bf16.mxu0 0
    %3180 = vmatmul.mubr.bf16.gmra.mrb[0].mxu0 %v2628
    %v3181 = vpop.f32.mrb[0].mxu0
    %v3182 = vadd.f32 %v2997, %v3181
    %v3183 = vpop.f32.mrb[0].mxu0
    %v3184 = vpop.f32.mrb[0].mxu0
    %v3185 = vadd.f32 %v3000, %v3184
    %v3186 = vpop.f32.mrb[0].mxu0
    %3187 = vmatprep.mubr.bf16.mxu0 0
    %3188 = vmatmul.mubr.bf16.gmra.mrb[0].mxu0 %v2631
    %v3189 = vpop.f32.mrb[0].mxu0
    %v3190 = vadd.f32 %v3005, %v3189
    %v3191 = vpop.f32.mrb[0].mxu0
    %v3192 = vpop.f32.mrb[0].mxu0
    %v3193 = vadd.f32 %v3008, %v3192
    %v3194 = vpop.f32.mrb[0].mxu0
    %3195 = vmatprep.mubr.bf16.mxu0 0
    %3196 = vmatmul.mubr.bf16.gmra.mrb[0].mxu0 %v2634
    %v3197 = vpop.f32.mrb[0].mxu0
    %v3198 = vadd.f32 %v3013, %v3197
    %v3199 = vpop.f32.mrb[0].mxu0
    %v3200 = vpop.f32.mrb[0].mxu0
    %v3201 = vadd.f32 %v3016, %v3200
    %v3202 = vpop.f32.mrb[0].mxu0
    %3203 = vdwg.mxu0
    %v3204 = vtanh.pop %v3054
    %v3205 = vtanh.pop %v3057
    %v3206 = vtanh.pop %v3062
    %v3207 = vtanh.pop %v3065
    %v3208 = vtanh.pop %v3070
    %v3209 = vtanh.pop %v3073
    %v3210 = vtanh.pop %v3078
    %v3211 = vtanh.pop %v3081
    %v3212 = vtanh.pop %v3086
    %v3213 = vtanh.pop %v3089
    %v3214 = vtanh.pop %v3094
    %v3215 = vtanh.pop %v3097
    %v3216 = vtanh.pop %v3102
    %v3217 = vtanh.pop %v3105
    %v3218 = vtanh.pop %v3110
    %v3219 = vtanh.pop %v3113
    %v3220 = vtanh.pop %v3118
    %v3221 = vtanh.pop %v3121
    %v3222 = vtanh.pop %v3126
    %v3223 = vtanh.pop %v3129
    %v3224 = vtanh.pop %v3134
    %v3225 = vtanh.pop %v3137
    %v3226 = vtanh.pop %v3142
    %v3227 = vtanh.pop %v3145
    %v3228 = vtanh.pop %v3150
    %v3229 = vtanh.pop %v3153
    %v3230 = vtanh.pop %v3158
    %v3231 = vtanh.pop %v3161
    %v3232 = vtanh.pop %v3166
    %v3233 = vtanh.pop %v3169
    %v3234 = vtanh.pop %v3174
    %v3235 = vtanh.pop %v3177
    %v3236 = vtanh.pop %v3182
    %v3237 = vtanh.pop %v3185
    %v3238 = vtanh.pop %v3190
    %v3239 = vtanh.pop %v3193
    %v3240 = vtanh.pop %v3198
    %v3241 = vtanh.pop %v3201
    %3242 = vst [vmem:[#allocation7] sm:$0xff] %v3204
    %3243 = vst [vmem:[#allocation7 + $0x8] sm:$0xff] %v3205
    %3244 = vst [vmem:[#allocation7 + $0x10] sm:$0xff] %v3206
    %3245 = vst [vmem:[#allocation7 + $0x18] sm:$0xff] %v3207
    %3246 = vst [vmem:[#allocation7 + $0x20] sm:$0xff] %v3208
    %3247 = vst [vmem:[#allocation7 + $0x28] sm:$0xff] %v3209
    %3248 = vst [vmem:[#allocation7 + $0x30] sm:$0xff] %v3210
    %3249 = vst [vmem:[#allocation7 + $0x38] sm:$0xff] %v3211
    %3250 = vst [vmem:[#allocation7 + $0x40] sm:$0xff] %v3212
    %3251 = vst [vmem:[#allocation7 + $0x48] sm:$0xff] %v3213
    %3252 = vst [vmem:[#allocation7 + $0x50] sm:$0xff] %v3214
    %3253 = vst [vmem:[#allocation7 + $0x58] sm:$0xff] %v3215
    %3254 = vst [vmem:[#allocation7 + $0x60] sm:$0xff] %v3216
    %3255 = vst [vmem:[#allocation7 + $0x68] sm:$0xff] %v3217
    %3256 = vst [vmem:[#allocation7 + $0x70] sm:$0xff] %v3218
    %3257 = vst [vmem:[#allocation7 + $0x78] sm:$0xff] %v3219
    %3258 = vst [vmem:[#allocation7 + $0x80] sm:$0xff] %v3220
    %3259 = vst [vmem:[#allocation7 + $0x88] sm:$0xff] %v3221
    %3260 = vst [vmem:[#allocation7 + $0x90] sm:$0xff] %v3222
    %3261 = vst [vmem:[#allocation7 + $0x98] sm:$0xff] %v3223
    %3262 = vst [vmem:[#allocation7 + $0xa0] sm:$0xff] %v3224
    %3263 = vst [vmem:[#allocation7 + $0xa8] sm:$0xff] %v3225
    %3264 = vst [vmem:[#allocation7 + $0xb0] sm:$0xff] %v3226
    %3265 = vst [vmem:[#allocation7 + $0xb8] sm:$0xff] %v3227
    %3266 = vst [vmem:[#allocation7 + $0xc0] sm:$0xff] %v3228
    %3267 = vst [vmem:[#allocation7 + $0xc8] sm:$0xff] %v3229
    %3268 = vst [vmem:[#allocation7 + $0xd0] sm:$0xff] %v3230
    %3269 = vst [vmem:[#allocation7 + $0xd8] sm:$0xff] %v3231
    %3270 = vst [vmem:[#allocation7 + $0xe0] sm:$0xff] %v3232
    %3271 = vst [vmem:[#allocation7 + $0xe8] sm:$0xff] %v3233
    %3272 = vst [vmem:[#allocation7 + $0xf0] sm:$0xff] %v3234
    %3273 = vst [vmem:[#allocation7 + $0xf8] sm:$0xff] %v3235
    %3274 = vst [vmem:[#allocation7 + $0x100] sm:$0xff] %v3236
    %3275 = vst [vmem:[#allocation7 + $0x108] sm:$0xff] %v3237
    %3276 = vst [vmem:[#allocation7 + $0x110] sm:$0xff] %v3238
    %3277 = vst [vmem:[#allocation7 + $0x118] sm:$0xff] %v3239
    %3278 = vst [vmem:[#allocation7 + $0x120] sm:$0xff] %v3240
    %3279 = vst [vmem:[#allocation7 + $0x128] sm:$0xff] %v3241
    // Predicated region
    $region38: #{tpu_custom_call.1} parent=1 // pred_check
      _
    $region39: #{tpu_custom_call.1} parent=1 // pred_check_branch
      %3281 = sbr.rel (0) target = $region41
    $region40: #{tpu_custom_call.1} parent=1 // pred_region
      %s3283 = ssub.s32 4864, 4864
      %3284 = vsyncadd [#allocation4], %s3283
      %s3285 = sshll.u32 [#allocation7], 4
      %s3286 = int_to_ptr.vmem [resolvable:$true] %s3285
      %3291 = dma.vmem_to_hbm [thread:$0]  %s3286, 4864, %s7, [#allocation4], 128, 128, 8
    $region41: #{tpu_custom_call.1} parent=1 // pred_fallthru
      _
    // Predicated region
    $region42: #{tpu_custom_call.1} parent=1 // pred_check
      _
    $region43: #{tpu_custom_call.1} parent=1 // pred_check_branch
      %3293 = sbr.rel (0) target = $region45
    $region44: #{tpu_custom_call.1} parent=1 // pred_region
      %3294 = dma.done [#allocation4], 4864
    $region45: #{tpu_custom_call.1} parent=1 // pred_fallthru
      _
    %3295 = vsyncpa [#allocation3], 1
    %3296 = vsyncpa [#allocation6], 1
    %3297 = vsyncpa [#allocation4], 1

</llo_original>
